<compile_context>
chip_gen: v6e
topology: v6e:2x2x1
jax: 0.10.0
libtpu: 0.0.40
codegen_flags: <defaults>
</compile_context>

<pallas_src>
from functools import partial
from math import sqrt

import jax
import jax.numpy as jnp
from jax import lax
from jax.experimental import pallas as pl
from jax.experimental.pallas import tpu as pltpu


def _inf_cube(t):
    # TODO(synk): `inf_cube` is referenced but not defined in the source module;
    # implemented as identity (both kernel and reference use it identically).
    # NOTE: the host-side fold of proj_out / biases into the V projection weights
    # is only valid while inf_cube remains the identity.
    return t


# ------------------------------- kernel -------------------------------------
def attention_kernel(x_ref, wf_ref, cos_ref, sin_ref, o_ref, *,
                     batch_block, seq, num_heads, dim_proj, dim_out):
    H, P, Y = num_heads, dim_proj, dim_out
    HP, HY = H * P, H * Y
    inv_sqrt_da = 1.0 / sqrt(P)

    # One fused projection matmul for the whole (batch_block * seq) row-block.
    # x carries a trailing constant-1 column; wf carries a matching bias row, so
    # the v' columns already include (v_bias @ proj_out) (+ proj_out_bias, head 0).
    #   columns = [ q(HP) | q@R(HP) | k(HP) | k@R(HP) | v'(HY) ]   (head-major)
    x = x_ref[...]                                                  # (bb*S, Din+1)
    proj = jnp.dot(x, wf_ref[...], preferred_element_type=jnp.float32)

    q_all = proj[:, 0 * HP:1 * HP]
    qR_all = proj[:, 1 * HP:2 * HP]
    k_all = proj[:, 2 * HP:3 * HP]
    kR_all = proj[:, 3 * HP:4 * HP]
    vp_all = proj[:, 4 * HP:4 * HP + HY]     # (v + v_bias) @ proj_out (+ out bias)

    cos = cos_ref[...]                       # (S, HP) -- shared by every batch row
    sin = sin_ref[...]

    # TODO(synk): if S / dim_out ever grow, pad per-head column blocks to 128
    # lanes and emit a lane-dense output slab; unnecessary at this size.
    for b in range(batch_block):             # tiny static batch loop (capped)
        r0 = b * seq
        # Rotary (rotate_half folded into the qR/kR weights) -> pure VPU fma.
        q_rot = q_all[r0:r0 + seq, :] * cos + qR_all[r0:r0 + seq, :] * sin
        k_rot = k_all[r0:r0 + seq, :] * cos + kR_all[r0:r0 + seq, :] * sin

        acc = None
        for h in range(H):                   # tiny static head loop
            qh = q_rot[:, h * P:(h + 1) * P]                        # (S, P)
            kh = k_rot[:, h * P:(h + 1) * P]                        # (S, P)
            vh = vp_all[r0:r0 + seq, h * Y:(h + 1) * Y]             # (S, Y)

            # scores[q, k] = <q_q, k_k> / sqrt(da)   (rhs contracted on dim 1)
            s = lax.dot_general(qh, kh, (((1,), (1,)), ((), ())),
                                preferred_element_type=jnp.float32) * inv_sqrt_da

            # softmax over the key axis (torch softmax(-2) on zqkh).
            m = jnp.max(s, axis=-1, keepdims=True)
            p = jnp.exp(s - m)
            denom = jnp.sum(p, axis=-1, keepdims=True)
            w = p * pl.reciprocal(denom, approx=True)   # EUP; denom >= 1 always
            # NaN guard dropped: masking not supported, so denom >= 1 always.

            oh = jnp.dot(w, vh, preferred_element_type=jnp.float32)
            acc = oh if acc is None else acc + oh   # == einsum('zqhx,hxy->zqy')

        o_ref[r0:r0 + seq, :] = _inf_cube(acc).astype(o_ref.dtype)


# ------------------------------- wrapper -------------------------------------
def _pick_batch_block(batch, seq):
    """One grid step for tiny (latency-bound) problems on every TPU generation;
    otherwise cap the statically-unrolled per-step batch loop (vreg-spill guard)."""
    if batch * seq <= 512:
        return batch
    bb = min(batch, 8)
    while batch % bb != 0:
        bb -= 1
    return bb


def attention_forward(x, wf, cos_hp, sin_hp, *, num_heads, dim_proj, dim_out,
                      batch_block=None):
    B, S, Din = x.shape
    H, P, Y = num_heads, dim_proj, dim_out
    HP, HY = H * P, H * Y
    WF = 4 * HP + HY
    assert wf.shape == (Din + 1, WF)

    if batch_block is None:
        batch_block = _pick_batch_block(B, S)
    if B % batch_block != 0:
        batch_block = 1
    steps = B // batch_block
    rows = batch_block * S

    # Append the constant-1 column that carries the folded biases.
    x_aug = jnp.concatenate(
        [x.reshape(B * S, Din), jnp.ones((B * S, 1), x.dtype)], axis=-1)

    kernel = partial(attention_kernel, batch_block=batch_block, seq=S,
                     num_heads=H, dim_proj=P, dim_out=Y)

    flops = (2 * B * S * (Din + 1) * WF      # fused projection (incl. bias row)
             + 4 * B * S * 2 * HP            # rotary fma (q and k)
             + 2 * B * H * S * S * P         # scores
             + 2 * B * H * S * S * Y)        # attn @ v'
    transcendentals = B * H * S * S + B * H * S
    # Constant-block-index operands (wf, cos, sin) are fetched once, not per step.
    bytes_accessed = 4 * (x_aug.size + wf.size + cos_hp.size + sin_hp.size
                          + B * S * Y)

    out2d = pl.pallas_call(
        kernel,
        out_shape=jax.ShapeDtypeStruct((B * S, Y), jnp.float32),
        grid=(steps,),
        in_specs=[
            pl.BlockSpec((rows, Din + 1), lambda z: (z, 0)),  # x (+ ones column)
            pl.BlockSpec((Din + 1, WF), lambda z: (0, 0)),    # fused [q|qR|k|kR|v'] weight
            pl.BlockSpec((S, HP), lambda z: (0, 0)),          # cos (seq x heads, no batch tiling)
            pl.BlockSpec((S, HP), lambda z: (0, 0)),          # sin
        ],
        out_specs=pl.BlockSpec((rows, Y), lambda z: (z, 0)),
        compiler_params=pltpu.CompilerParams(
            dimension_semantics=(("arbitrary",) if steps == 1 else ("parallel",))),
        cost_estimate=pl.CostEstimate(flops=int(flops),
                                      transcendentals=int(transcendentals),
                                      bytes_accessed=int(bytes_accessed)),
    )(x_aug, wf, cos_hp, sin_hp)

    return out2d.reshape(B, S, Y)


# ---------------------------- pure-JAX reference ----------------------------
def ref_forward(x, wq3, wk3, wv3, v_bias, proj_out, proj_out_bias, cos_t, sin_t):
    q = jnp.einsum('zki,ihp->zkhp', x, wq3)
    k = jnp.einsum('zki,ihp->zkhp', x, wk3)
    v = jnp.einsum('zki,iho->zkho', x, wv3)

    def rot_half(t):
        n1 = (t.shape[-1] + 1) // 2
        return jnp.concatenate([-t[..., n1:], t[..., :n1]], axis=-1)

    c = cos_t[None, :, None, :]
    s = sin_t[None, :, None, :]
    q = q * c + rot_half(q) * s
    k = k * c + rot_half(k) * s

    da = k.shape[-1]
    sw = jnp.einsum('zqha,zkha->zqkh', q, k) / jnp.sqrt(jnp.float32(da))
    w = jax.nn.softmax(sw, axis=-2)
    w = jnp.nan_to_num(w)
    o = jnp.einsum('zqkh,zkhx->zqhx', w, v + v_bias[None, None])
    out = jnp.einsum('zqhx,hxy->zqy', _inf_cube(o), proj_out) + proj_out_bias[None, None]
    return _inf_cube(out)


if __name__ == "__main__":
    DIM_IN, DIM_OUT, NUM_HEADS = 3, 5, 3
    DIM_PROJ = DIM_OUT            # dim_qk is None -> dim_proj = dim_out
    B, S = 2, 8

    key = jax.random.PRNGKey(0)
    kq, kk, kv, ko, kx = jax.random.split(key, 5)

    # deterministic "xavier_normal"-style init (std from torch fan rules)
    std_qkv = (2.0 / (DIM_IN * DIM_PROJ + NUM_HEADS * DIM_PROJ)) ** 0.5
    std_out = (2.0 / (DIM_OUT * DIM_OUT + NUM_HEADS * DIM_OUT)) ** 0.5
    wq3 = std_qkv * jax.random.normal(kq, (DIM_IN, NUM_HEADS, DIM_PROJ), jnp.float32)
    wk3 = std_qkv * jax.random.normal(kk, (DIM_IN, NUM_HEADS, DIM_PROJ), jnp.float32)
    wv3 = std_qkv * jax.random.normal(kv, (DIM_IN, NUM_HEADS, DIM_OUT), jnp.float32)
    v_bias = jnp.zeros((NUM_HEADS, DIM_OUT), jnp.float32)
    proj_out = std_out * jax.random.normal(ko, (NUM_HEADS, DIM_OUT, DIM_OUT), jnp.float32)
    proj_out_bias = jnp.zeros((DIM_OUT,), jnp.float32)

    # Rotary tables (matches Rotary.__init__ / pos_emb for dim_in = DIM_PROJ)
    n_half = (DIM_PROJ + 1) // 2
    exps = jnp.arange(n_half, dtype=jnp.float32) * (-2.0 / DIM_PROJ)
    freq_base = jnp.power(jnp.float32(10000.0), exps)
    freq = jnp.concatenate([freq_base, freq_base[: n_half - DIM_PROJ % 2]])
    pos = jnp.arange(S, dtype=jnp.float32)
    emb = pos[:, None] * freq[None, :]                     # (S, DIM_PROJ)
    cos_t = jnp.cos(emb)
    sin_t = jnp.sin(emb)

    # rotate_half as a (P, P) matrix:  rotate_half(x) = x @ R
    n1 = (DIM_PROJ + 1) // 2
    n2 = DIM_PROJ - n1
    R = jnp.zeros((DIM_PROJ, DIM_PROJ), jnp.float32)
    R = R.at[jnp.arange(n2) + n1, jnp.arange(n2)].set(-1.0)   # -x2 part
    R = R.at[jnp.arange(n1), jnp.arange(n1) + n2].set(1.0)    #  x1 part

    # Host-side algebraic folds (valid because inf_cube == identity):
    #   v'_h   = wv_h @ proj_out_h
    #   vb'_h  = v_bias_h @ proj_out_h   (+ proj_out_bias folded into head 0,
    #            exact because each head's softmax row sums to 1)
    wvp = jnp.einsum('ihx,hxy->ihy', wv3, proj_out)           # (Din, H, Y)
    vbp = jnp.einsum('hx,hxy->hy', v_bias, proj_out)          # (H, Y)
    vbp = vbp.at[0].add(proj_out_bias)

    HP = NUM_HEADS * DIM_PROJ
    HY = NUM_HEADS * DIM_OUT
    wq_flat = wq3.reshape(DIM_IN, HP)
    wk_flat = wk3.reshape(DIM_IN, HP)
    wqR_flat = jnp.einsum('ihp,pq->ihq', wq3, R).reshape(DIM_IN, HP)
    wkR_flat = jnp.einsum('ihp,pq->ihq', wk3, R).reshape(DIM_IN, HP)
    wvp_flat = wvp.reshape(DIM_IN, HY)
    wf_top = jnp.concatenate([wq_flat, wqR_flat, wk_flat, wkR_flat, wvp_flat], axis=-1)
    bias_row = jnp.concatenate([jnp.zeros((1, 4 * HP), jnp.float32),
                                vbp.reshape(1, HY)], axis=-1)
    wf = jnp.concatenate([wf_top, bias_row], axis=0)          # (Din+1, 4*HP + HY)

    # cos/sin tiled over heads only -> (S, H*P); shared by all batch rows.
    cos_hp = jnp.tile(cos_t, (1, NUM_HEADS))
    sin_hp = jnp.tile(sin_t, (1, NUM_HEADS))

    x = jax.random.normal(kx, (B, S, DIM_IN), jnp.float32)

    out = attention_forward(x, wf, cos_hp, sin_hp, num_heads=NUM_HEADS,
                            dim_proj=DIM_PROJ, dim_out=DIM_OUT)
    out = jax.block_until_ready(out)

    ref = ref_forward(x, wq3, wk3, wv3, v_bias, proj_out, proj_out_bias, cos_t, sin_t)
    assert out.shape == (B, S, DIM_OUT)
    assert jnp.allclose(out, ref, rtol=2e-3, atol=1e-3), \
        f"max abs err {jnp.max(jnp.abs(out - ref))}"

    print("KERNEL_OK")
</pallas_src>

<mosaic_0001>
module attributes {stable_mosaic.version = 11 : i64} {
  func.func @attention_kernel(%arg0: i32, %arg1: memref<16x4xf32, #tpu.memory_space<vmem>>, %arg2: memref<4x75xf32, #tpu.memory_space<vmem>>, %arg3: memref<8x15xf32, #tpu.memory_space<vmem>>, %arg4: memref<8x15xf32, #tpu.memory_space<vmem>>, %arg5: memref<16x5xf32, #tpu.memory_space<vmem>>) attributes {dimension_semantics = [#tpu.dimension_semantics<arbitrary>], iteration_bounds = array<i64: 1>, scalar_prefetch = 0 : i64, scratch_operands = 0 : i64, tpu.core_type = #tpu.core_type<tc>, window_params = [{transform_indices = @transform_0, window_bounds = array<i64: 16, 4>}, {pipeline_mode = #tpu.pipeline_mode<synchronous>, transform_indices = @transform_1, window_bounds = array<i64: 4, 75>}, {pipeline_mode = #tpu.pipeline_mode<synchronous>, transform_indices = @transform_2, window_bounds = array<i64: 8, 15>}, {pipeline_mode = #tpu.pipeline_mode<synchronous>, transform_indices = @transform_3, window_bounds = array<i64: 8, 15>}, {transform_indices = @transform_4, window_bounds = array<i64: 16, 5>}]} {
    %c0 = arith.constant 0 : index
    %c0_0 = arith.constant 0 : index
    %0 = vector.load %arg1[%c0, %c0_0] : memref<16x4xf32, #tpu.memory_space<vmem>>, vector<16x4xf32>
    %c0_1 = arith.constant 0 : index
    %c0_2 = arith.constant 0 : index
    %1 = vector.load %arg2[%c0_1, %c0_2] : memref<4x75xf32, #tpu.memory_space<vmem>>, vector<4x75xf32>
    %cst = arith.constant dense<0.000000e+00> : vector<16x75xf32>
    %2 = tpu.matmul %0, %1, %cst {dimension_numbers = #tpu.dot_dimension_numbers<[1], [0], [0], [1], [0, 0, 1, 1], [], []>} : vector<16x4xf32>, vector<4x75xf32>, vector<16x75xf32> -> vector<16x75xf32>
    %3 = vector.extract_strided_slice %2 {offsets = [0, 0], sizes = [16, 15], strides = [1, 1]} : vector<16x75xf32> to vector<16x15xf32>
    %4 = vector.extract_strided_slice %2 {offsets = [0, 15], sizes = [16, 15], strides = [1, 1]} : vector<16x75xf32> to vector<16x15xf32>
    %5 = vector.extract_strided_slice %2 {offsets = [0, 30], sizes = [16, 15], strides = [1, 1]} : vector<16x75xf32> to vector<16x15xf32>
    %6 = vector.extract_strided_slice %2 {offsets = [0, 45], sizes = [16, 15], strides = [1, 1]} : vector<16x75xf32> to vector<16x15xf32>
    %7 = vector.extract_strided_slice %2 {offsets = [0, 60], sizes = [16, 15], strides = [1, 1]} : vector<16x75xf32> to vector<16x15xf32>
    %c0_3 = arith.constant 0 : index
    %c0_4 = arith.constant 0 : index
    %8 = vector.load %arg3[%c0_3, %c0_4] : memref<8x15xf32, #tpu.memory_space<vmem>>, vector<8x15xf32>
    %c0_5 = arith.constant 0 : index
    %c0_6 = arith.constant 0 : index
    %9 = vector.load %arg4[%c0_5, %c0_6] : memref<8x15xf32, #tpu.memory_space<vmem>>, vector<8x15xf32>
    %10 = vector.extract_strided_slice %3 {offsets = [0, 0], sizes = [8, 15], strides = [1, 1]} : vector<16x15xf32> to vector<8x15xf32>
    %11 = arith.mulf %10, %8 : vector<8x15xf32>
    %12 = vector.extract_strided_slice %4 {offsets = [0, 0], sizes = [8, 15], strides = [1, 1]} : vector<16x15xf32> to vector<8x15xf32>
    %13 = arith.mulf %12, %9 : vector<8x15xf32>
    %14 = arith.addf %11, %13 : vector<8x15xf32>
    %15 = vector.extract_strided_slice %5 {offsets = [0, 0], sizes = [8, 15], strides = [1, 1]} : vector<16x15xf32> to vector<8x15xf32>
    %16 = arith.mulf %15, %8 : vector<8x15xf32>
    %17 = vector.extract_strided_slice %6 {offsets = [0, 0], sizes = [8, 15], strides = [1, 1]} : vector<16x15xf32> to vector<8x15xf32>
    %18 = arith.mulf %17, %9 : vector<8x15xf32>
    %19 = arith.addf %16, %18 : vector<8x15xf32>
    %20 = vector.extract_strided_slice %14 {offsets = [0, 0], sizes = [8, 5], strides = [1, 1]} : vector<8x15xf32> to vector<8x5xf32>
    %21 = vector.extract_strided_slice %19 {offsets = [0, 0], sizes = [8, 5], strides = [1, 1]} : vector<8x15xf32> to vector<8x5xf32>
    %22 = vector.extract_strided_slice %7 {offsets = [0, 0], sizes = [8, 5], strides = [1, 1]} : vector<16x15xf32> to vector<8x5xf32>
    %cst_7 = arith.constant dense<0.000000e+00> : vector<8x8xf32>
    %23 = tpu.matmul %20, %21, %cst_7 {dimension_numbers = #tpu.dot_dimension_numbers<[1], [1], [0], [0], [0, 0, 1, 0], [], []>} : vector<8x5xf32>, vector<8x5xf32>, vector<8x8xf32> -> vector<8x8xf32>
    %cst_8 = arith.constant 0.44721359 : f32
    %24 = vector.broadcast %cst_8 : f32 to vector<8x8xf32>
    %25 = arith.mulf %23, %24 : vector<8x8xf32>
    %cst_9 = arith.constant dense<0xFF800000> : vector<8xf32>
    %26 = vector.multi_reduction <maximumf>, %25, %cst_9 [1] : vector<8x8xf32> to vector<8xf32>
    %27 = vector.shape_cast %26 : vector<8xf32> to vector<8x1xf32>
    %28 = vector.broadcast %27 : vector<8x1xf32> to vector<8x8xf32>
    %29 = arith.subf %25, %28 : vector<8x8xf32>
    %30 = math.exp %29 : vector<8x8xf32>
    %cst_10 = arith.constant dense<0.000000e+00> : vector<8xf32>
    %31 = vector.multi_reduction <add>, %30, %cst_10 [1] : vector<8x8xf32> to vector<8xf32>
    %32 = vector.shape_cast %31 : vector<8xf32> to vector<8x1xf32>
    %33 = tpu.reciprocal %32 {approx = true} : vector<8x1xf32> -> vector<8x1xf32>
    %34 = vector.broadcast %33 : vector<8x1xf32> to vector<8x8xf32>
    %35 = arith.mulf %30, %34 : vector<8x8xf32>
    %cst_11 = arith.constant dense<0.000000e+00> : vector<8x5xf32>
    %36 = tpu.matmul %35, %22, %cst_11 {dimension_numbers = #tpu.dot_dimension_numbers<[1], [0], [0], [1], [0, 0, 1, 1], [], []>} : vector<8x8xf32>, vector<8x5xf32>, vector<8x5xf32> -> vector<8x5xf32>
    %37 = vector.extract_strided_slice %14 {offsets = [0, 5], sizes = [8, 5], strides = [1, 1]} : vector<8x15xf32> to vector<8x5xf32>
    %38 = vector.extract_strided_slice %19 {offsets = [0, 5], sizes = [8, 5], strides = [1, 1]} : vector<8x15xf32> to vector<8x5xf32>
    %39 = vector.extract_strided_slice %7 {offsets = [0, 5], sizes = [8, 5], strides = [1, 1]} : vector<16x15xf32> to vector<8x5xf32>
    %cst_12 = arith.constant dense<0.000000e+00> : vector<8x8xf32>
    %40 = tpu.matmul %37, %38, %cst_12 {dimension_numbers = #tpu.dot_dimension_numbers<[1], [1], [0], [0], [0, 0, 1, 0], [], []>} : vector<8x5xf32>, vector<8x5xf32>, vector<8x8xf32> -> vector<8x8xf32>
    %cst_13 = arith.constant 0.44721359 : f32
    %41 = vector.broadcast %cst_13 : f32 to vector<8x8xf32>
    %42 = arith.mulf %40, %41 : vector<8x8xf32>
    %cst_14 = arith.constant dense<0xFF800000> : vector<8xf32>
    %43 = vector.multi_reduction <maximumf>, %42, %cst_14 [1] : vector<8x8xf32> to vector<8xf32>
    %44 = vector.shape_cast %43 : vector<8xf32> to vector<8x1xf32>
    %45 = vector.broadcast %44 : vector<8x1xf32> to vector<8x8xf32>
    %46 = arith.subf %42, %45 : vector<8x8xf32>
    %47 = math.exp %46 : vector<8x8xf32>
    %cst_15 = arith.constant dense<0.000000e+00> : vector<8xf32>
    %48 = vector.multi_reduction <add>, %47, %cst_15 [1] : vector<8x8xf32> to vector<8xf32>
    %49 = vector.shape_cast %48 : vector<8xf32> to vector<8x1xf32>
    %50 = tpu.reciprocal %49 {approx = true} : vector<8x1xf32> -> vector<8x1xf32>
    %51 = vector.broadcast %50 : vector<8x1xf32> to vector<8x8xf32>
    %52 = arith.mulf %47, %51 : vector<8x8xf32>
    %cst_16 = arith.constant dense<0.000000e+00> : vector<8x5xf32>
    %53 = tpu.matmul %52, %39, %cst_16 {dimension_numbers = #tpu.dot_dimension_numbers<[1], [0], [0], [1], [0, 0, 1, 1], [], []>} : vector<8x8xf32>, vector<8x5xf32>, vector<8x5xf32> -> vector<8x5xf32>
    %54 = arith.addf %36, %53 : vector<8x5xf32>
    %55 = vector.extract_strided_slice %14 {offsets = [0, 10], sizes = [8, 5], strides = [1, 1]} : vector<8x15xf32> to vector<8x5xf32>
    %56 = vector.extract_strided_slice %19 {offsets = [0, 10], sizes = [8, 5], strides = [1, 1]} : vector<8x15xf32> to vector<8x5xf32>
    %57 = vector.extract_strided_slice %7 {offsets = [0, 10], sizes = [8, 5], strides = [1, 1]} : vector<16x15xf32> to vector<8x5xf32>
    %cst_17 = arith.constant dense<0.000000e+00> : vector<8x8xf32>
    %58 = tpu.matmul %55, %56, %cst_17 {dimension_numbers = #tpu.dot_dimension_numbers<[1], [1], [0], [0], [0, 0, 1, 0], [], []>} : vector<8x5xf32>, vector<8x5xf32>, vector<8x8xf32> -> vector<8x8xf32>
    %cst_18 = arith.constant 0.44721359 : f32
    %59 = vector.broadcast %cst_18 : f32 to vector<8x8xf32>
    %60 = arith.mulf %58, %59 : vector<8x8xf32>
    %cst_19 = arith.constant dense<0xFF800000> : vector<8xf32>
    %61 = vector.multi_reduction <maximumf>, %60, %cst_19 [1] : vector<8x8xf32> to vector<8xf32>
    %62 = vector.shape_cast %61 : vector<8xf32> to vector<8x1xf32>
    %63 = vector.broadcast %62 : vector<8x1xf32> to vector<8x8xf32>
    %64 = arith.subf %60, %63 : vector<8x8xf32>
    %65 = math.exp %64 : vector<8x8xf32>
    %cst_20 = arith.constant dense<0.000000e+00> : vector<8xf32>
    %66 = vector.multi_reduction <add>, %65, %cst_20 [1] : vector<8x8xf32> to vector<8xf32>
    %67 = vector.shape_cast %66 : vector<8xf32> to vector<8x1xf32>
    %68 = tpu.reciprocal %67 {approx = true} : vector<8x1xf32> -> vector<8x1xf32>
    %69 = vector.broadcast %68 : vector<8x1xf32> to vector<8x8xf32>
    %70 = arith.mulf %65, %69 : vector<8x8xf32>
    %cst_21 = arith.constant dense<0.000000e+00> : vector<8x5xf32>
    %71 = tpu.matmul %70, %57, %cst_21 {dimension_numbers = #tpu.dot_dimension_numbers<[1], [0], [0], [1], [0, 0, 1, 1], [], []>} : vector<8x8xf32>, vector<8x5xf32>, vector<8x5xf32> -> vector<8x5xf32>
    %72 = arith.addf %54, %71 : vector<8x5xf32>
    %c0_22 = arith.constant 0 : index
    %c0_23 = arith.constant 0 : index
    %73 = vector.load %arg5[%c0_22, %c0_23] : memref<16x5xf32, #tpu.memory_space<vmem>>, vector<8x5xf32>
    tpu.vector_store %arg5[%c0_22, %c0_23], %72 {strides = array<i32>} : memref<16x5xf32, #tpu.memory_space<vmem>>, vector<8x5xf32>,
    %74 = vector.extract_strided_slice %3 {offsets = [8, 0], sizes = [8, 15], strides = [1, 1]} : vector<16x15xf32> to vector<8x15xf32>
    %75 = arith.mulf %74, %8 : vector<8x15xf32>
    %76 = vector.extract_strided_slice %4 {offsets = [8, 0], sizes = [8, 15], strides = [1, 1]} : vector<16x15xf32> to vector<8x15xf32>
    %77 = arith.mulf %76, %9 : vector<8x15xf32>
    %78 = arith.addf %75, %77 : vector<8x15xf32>
    %79 = vector.extract_strided_slice %5 {offsets = [8, 0], sizes = [8, 15], strides = [1, 1]} : vector<16x15xf32> to vector<8x15xf32>
    %80 = arith.mulf %79, %8 : vector<8x15xf32>
    %81 = vector.extract_strided_slice %6 {offsets = [8, 0], sizes = [8, 15], strides = [1, 1]} : vector<16x15xf32> to vector<8x15xf32>
    %82 = arith.mulf %81, %9 : vector<8x15xf32>
    %83 = arith.addf %80, %82 : vector<8x15xf32>
    %84 = vector.extract_strided_slice %78 {offsets = [0, 0], sizes = [8, 5], strides = [1, 1]} : vector<8x15xf32> to vector<8x5xf32>
    %85 = vector.extract_strided_slice %83 {offsets = [0, 0], sizes = [8, 5], strides = [1, 1]} : vector<8x15xf32> to vector<8x5xf32>
    %86 = vector.extract_strided_slice %7 {offsets = [8, 0], sizes = [8, 5], strides = [1, 1]} : vector<16x15xf32> to vector<8x5xf32>
    %cst_24 = arith.constant dense<0.000000e+00> : vector<8x8xf32>
    %87 = tpu.matmul %84, %85, %cst_24 {dimension_numbers = #tpu.dot_dimension_numbers<[1], [1], [0], [0], [0, 0, 1, 0], [], []>} : vector<8x5xf32>, vector<8x5xf32>, vector<8x8xf32> -> vector<8x8xf32>
    %cst_25 = arith.constant 0.44721359 : f32
    %88 = vector.broadcast %cst_25 : f32 to vector<8x8xf32>
    %89 = arith.mulf %87, %88 : vector<8x8xf32>
    %cst_26 = arith.constant dense<0xFF800000> : vector<8xf32>
    %90 = vector.multi_reduction <maximumf>, %89, %cst_26 [1] : vector<8x8xf32> to vector<8xf32>
    %91 = vector.shape_cast %90 : vector<8xf32> to vector<8x1xf32>
    %92 = vector.broadcast %91 : vector<8x1xf32> to vector<8x8xf32>
    %93 = arith.subf %89, %92 : vector<8x8xf32>
    %94 = math.exp %93 : vector<8x8xf32>
    %cst_27 = arith.constant dense<0.000000e+00> : vector<8xf32>
    %95 = vector.multi_reduction <add>, %94, %cst_27 [1] : vector<8x8xf32> to vector<8xf32>
    %96 = vector.shape_cast %95 : vector<8xf32> to vector<8x1xf32>
    %97 = tpu.reciprocal %96 {approx = true} : vector<8x1xf32> -> vector<8x1xf32>
    %98 = vector.broadcast %97 : vector<8x1xf32> to vector<8x8xf32>
    %99 = arith.mulf %94, %98 : vector<8x8xf32>
    %cst_28 = arith.constant dense<0.000000e+00> : vector<8x5xf32>
    %100 = tpu.matmul %99, %86, %cst_28 {dimension_numbers = #tpu.dot_dimension_numbers<[1], [0], [0], [1], [0, 0, 1, 1], [], []>} : vector<8x8xf32>, vector<8x5xf32>, vector<8x5xf32> -> vector<8x5xf32>
    %101 = vector.extract_strided_slice %78 {offsets = [0, 5], sizes = [8, 5], strides = [1, 1]} : vector<8x15xf32> to vector<8x5xf32>
    %102 = vector.extract_strided_slice %83 {offsets = [0, 5], sizes = [8, 5], strides = [1, 1]} : vector<8x15xf32> to vector<8x5xf32>
    %103 = vector.extract_strided_slice %7 {offsets = [8, 5], sizes = [8, 5], strides = [1, 1]} : vector<16x15xf32> to vector<8x5xf32>
    %cst_29 = arith.constant dense<0.000000e+00> : vector<8x8xf32>
    %104 = tpu.matmul %101, %102, %cst_29 {dimension_numbers = #tpu.dot_dimension_numbers<[1], [1], [0], [0], [0, 0, 1, 0], [], []>} : vector<8x5xf32>, vector<8x5xf32>, vector<8x8xf32> -> vector<8x8xf32>
    %cst_30 = arith.constant 0.44721359 : f32
    %105 = vector.broadcast %cst_30 : f32 to vector<8x8xf32>
    %106 = arith.mulf %104, %105 : vector<8x8xf32>
    %cst_31 = arith.constant dense<0xFF800000> : vector<8xf32>
    %107 = vector.multi_reduction <maximumf>, %106, %cst_31 [1] : vector<8x8xf32> to vector<8xf32>
    %108 = vector.shape_cast %107 : vector<8xf32> to vector<8x1xf32>
    %109 = vector.broadcast %108 : vector<8x1xf32> to vector<8x8xf32>
    %110 = arith.subf %106, %109 : vector<8x8xf32>
    %111 = math.exp %110 : vector<8x8xf32>
    %cst_32 = arith.constant dense<0.000000e+00> : vector<8xf32>
    %112 = vector.multi_reduction <add>, %111, %cst_32 [1] : vector<8x8xf32> to vector<8xf32>
    %113 = vector.shape_cast %112 : vector<8xf32> to vector<8x1xf32>
    %114 = tpu.reciprocal %113 {approx = true} : vector<8x1xf32> -> vector<8x1xf32>
    %115 = vector.broadcast %114 : vector<8x1xf32> to vector<8x8xf32>
    %116 = arith.mulf %111, %115 : vector<8x8xf32>
    %cst_33 = arith.constant dense<0.000000e+00> : vector<8x5xf32>
    %117 = tpu.matmul %116, %103, %cst_33 {dimension_numbers = #tpu.dot_dimension_numbers<[1], [0], [0], [1], [0, 0, 1, 1], [], []>} : vector<8x8xf32>, vector<8x5xf32>, vector<8x5xf32> -> vector<8x5xf32>
    %118 = arith.addf %100, %117 : vector<8x5xf32>
    %119 = vector.extract_strided_slice %78 {offsets = [0, 10], sizes = [8, 5], strides = [1, 1]} : vector<8x15xf32> to vector<8x5xf32>
    %120 = vector.extract_strided_slice %83 {offsets = [0, 10], sizes = [8, 5], strides = [1, 1]} : vector<8x15xf32> to vector<8x5xf32>
    %121 = vector.extract_strided_slice %7 {offsets = [8, 10], sizes = [8, 5], strides = [1, 1]} : vector<16x15xf32> to vector<8x5xf32>
    %cst_34 = arith.constant dense<0.000000e+00> : vector<8x8xf32>
    %122 = tpu.matmul %119, %120, %cst_34 {dimension_numbers = #tpu.dot_dimension_numbers<[1], [1], [0], [0], [0, 0, 1, 0], [], []>} : vector<8x5xf32>, vector<8x5xf32>, vector<8x8xf32> -> vector<8x8xf32>
    %cst_35 = arith.constant 0.44721359 : f32
    %123 = vector.broadcast %cst_35 : f32 to vector<8x8xf32>
    %124 = arith.mulf %122, %123 : vector<8x8xf32>
    %cst_36 = arith.constant dense<0xFF800000> : vector<8xf32>
    %125 = vector.multi_reduction <maximumf>, %124, %cst_36 [1] : vector<8x8xf32> to vector<8xf32>
    %126 = vector.shape_cast %125 : vector<8xf32> to vector<8x1xf32>
    %127 = vector.broadcast %126 : vector<8x1xf32> to vector<8x8xf32>
    %128 = arith.subf %124, %127 : vector<8x8xf32>
    %129 = math.exp %128 : vector<8x8xf32>
    %cst_37 = arith.constant dense<0.000000e+00> : vector<8xf32>
    %130 = vector.multi_reduction <add>, %129, %cst_37 [1] : vector<8x8xf32> to vector<8xf32>
    %131 = vector.shape_cast %130 : vector<8xf32> to vector<8x1xf32>
    %132 = tpu.reciprocal %131 {approx = true} : vector<8x1xf32> -> vector<8x1xf32>
    %133 = vector.broadcast %132 : vector<8x1xf32> to vector<8x8xf32>
    %134 = arith.mulf %129, %133 : vector<8x8xf32>
    %cst_38 = arith.constant dense<0.000000e+00> : vector<8x5xf32>
    %135 = tpu.matmul %134, %121, %cst_38 {dimension_numbers = #tpu.dot_dimension_numbers<[1], [0], [0], [1], [0, 0, 1, 1], [], []>} : vector<8x8xf32>, vector<8x5xf32>, vector<8x5xf32> -> vector<8x5xf32>
    %136 = arith.addf %118, %135 : vector<8x5xf32>
    %c8 = arith.constant 8 : index
    %c0_39 = arith.constant 0 : index
    %137 = vector.load %arg5[%c8, %c0_39] : memref<16x5xf32, #tpu.memory_space<vmem>>, vector<8x5xf32>
    tpu.vector_store %arg5[%c8, %c0_39], %136 {strides = array<i32>} : memref<16x5xf32, #tpu.memory_space<vmem>>, vector<8x5xf32>,
    return
  }
  func.func @transform_0(%arg0: i32) -> (i32, i32) {
    %c0_i32 = arith.constant 0 : i32
    %c0_i32_0 = arith.constant 0 : i32
    return %arg0, %c0_i32 : i32, i32
  }
  func.func @transform_1(%arg0: i32) -> (i32, i32) {
    %c0_i32 = arith.constant 0 : i32
    %c0_i32_0 = arith.constant 0 : i32
    %c0_i32_1 = arith.constant 0 : i32
    return %c0_i32, %c0_i32_0 : i32, i32
  }
  func.func @transform_2(%arg0: i32) -> (i32, i32) {
    %c0_i32 = arith.constant 0 : i32
    %c0_i32_0 = arith.constant 0 : i32
    %c0_i32_1 = arith.constant 0 : i32
    return %c0_i32, %c0_i32_0 : i32, i32
  }
  func.func @transform_3(%arg0: i32) -> (i32, i32) {
    %c0_i32 = arith.constant 0 : i32
    %c0_i32_0 = arith.constant 0 : i32
    %c0_i32_1 = arith.constant 0 : i32
    return %c0_i32, %c0_i32_0 : i32, i32
  }
  func.func @transform_4(%arg0: i32) -> (i32, i32) {
    %c0_i32 = arith.constant 0 : i32
    %c0_i32_0 = arith.constant 0 : i32
    return %arg0, %c0_i32 : i32, i32
  }
}

</mosaic_0001>

<llo_original>
// kernel: tpu_custom_call.1
$region0: #{tpu_custom_call.1}
  #allocation0 [shape = 'u32[]', space=smem, size = 0x4, offset = 0x4, fixed_abs, tag = 'smem constant byte address 0x4 - core index']
  #allocation1 [shape = 'u32[144,128]{1,0:T(1,128)}', space=vmem, size = 0x12000, scoped, tag = 'internal scratch']
  %s0 = inlined_call_operand.vmem [shape: f32[16,4], index: 0, kind: input, shape index: {}]
  %s1 = inlined_call_operand.vmem [shape: f32[4,75], index: 1, kind: input, shape index: {}]
  %s2 = inlined_call_operand.vmem [shape: f32[8,15], index: 2, kind: input, shape index: {}]
  %s3 = inlined_call_operand.vmem [shape: f32[8,15], index: 3, kind: input, shape index: {}]
  %s4 = inlined_call_operand.vmem [shape: f32[16,5], index: 4, kind: output, shape index: {}]
  %s5 = sld [smem:[#allocation0]]
  $region26: #{tpu_custom_call.1} parent=0
    _
  %s7 = ssub.s32 1, %s5
  %s8 = scalar_select 0, %s7, %s5
  // Predicated region
  $region2: #{tpu_custom_call.1} parent=0 // pred_check
    _
  $region3: #{tpu_custom_call.1} parent=0 // pred_check_branch
    %10 = sbr.rel (0) target = $region5
  $region4: #{tpu_custom_call.1} parent=0 // pred_region
    _
  $region5: #{tpu_custom_call.1} parent=0 // pred_fallthru
    _
  // Predicated region
  $region6: #{tpu_custom_call.1} parent=0 // pred_check
    _
  $region7: #{tpu_custom_call.1} parent=0 // pred_check_branch
    %12 = sbr.rel (0) target = $region9
  $region8: #{tpu_custom_call.1} parent=0 // pred_region
    _
  $region9: #{tpu_custom_call.1} parent=0 // pred_fallthru
    _
  // Predicated region
  $region10: #{tpu_custom_call.1} parent=0 // pred_check
    _
  $region11: #{tpu_custom_call.1} parent=0 // pred_check_branch
    %14 = sbr.rel (0) target = $region13
  $region12: #{tpu_custom_call.1} parent=0 // pred_region
    _
  $region13: #{tpu_custom_call.1} parent=0 // pred_fallthru
    _
  // Predicated region
  $region14: #{tpu_custom_call.1} parent=0 // pred_check
    _
  $region15: #{tpu_custom_call.1} parent=0 // pred_check_branch
    %16 = sbr.rel (0) target = $region17
  $region16: #{tpu_custom_call.1} parent=0 // pred_region
    _
  $region17: #{tpu_custom_call.1} parent=0 // pred_fallthru
    _
  %v17 = vld [vmem:[%s0] sm:$0xff]
  %v18 = vld [vmem:[%s0 + $0x8] sm:$0xff]
  %v19 = vld [vmem:[%s1] sm:$0xf]
  %vm20 = vcmask 31744
  %v22 = vsel %vm20, %v17, 0
  %v25 = vsel %vm20, %v18, 0
  %vm27 = vcmask 1043456
  %v29 = vsel %vm27, %v19, 0
  %31 = vmatprep.subr.mxu0 0.0
  %32 = vmatpush1.msra.mxu0 0.0
  %33 = vmatprep.subr.mxu0 0.0
  %34 = vmatpush1.msra.mxu0 0.0
  %35 = vmatprep.subr.mxu0 0.0
  %36 = vmatpush1.msra.mxu0 0.0
  %37 = vmatprep.subr.mxu0 0.0
  %38 = vmatpush1.msra.mxu0 0.0
  %39 = vmatprep.subr.mxu0 0.0
  %40 = vmatpush1.msra.mxu0 0.0
  %41 = vmatprep.subr.mxu0 0.0
  %42 = vmatpush1.msra.mxu0 0.0
  %43 = vmatprep.subr.mxu0 0.0
  %44 = vmatpush1.msra.mxu0 0.0
  %45 = vmatprep.subr.mxu0 0.0
  %46 = vmatpush1.msra.mxu0 0.0
  %47 = vmatprep.subr.mxu0 0.0
  %48 = vmatpush1.msra.mxu0 0.0
  %49 = vmatprep.subr.mxu0 0.0
  %50 = vmatpush1.msra.mxu0 0.0
  %51 = vmatprep.subr.mxu0 0.0
  %52 = vmatpush1.msra.mxu0 0.0
  %53 = vmatprep.subr.mxu0 0.0
  %54 = vmatpush1.msra.mxu0 0.0
  %55 = vmatprep.subr.mxu0 0.0
  %56 = vmatpush1.msra.mxu0 0.0
  %57 = vmatprep.subr.mxu0 0.0
  %58 = vmatpush1.msra.mxu0 0.0
  %59 = vmatprep.subr.mxu0 0.0
  %60 = vmatpush1.msra.mxu0 0.0
  %61 = vmatprep.subr.mxu0 0.0
  %62 = vmatpush1.msra.mxu0 %v29
  %63 = vmatprep.subr.mxu0 0.0
  %64 = vmatpush2.msra.mxu0 0.0
  %65 = vmatprep.subr.mxu0 0.0
  %66 = vmatpush2.msra.mxu0 0.0
  %67 = vmatprep.subr.mxu0 0.0
  %68 = vmatpush2.msra.mxu0 0.0
  %69 = vmatprep.subr.mxu0 0.0
  %70 = vmatpush2.msra.mxu0 0.0
  %71 = vmatprep.subr.mxu0 0.0
  %72 = vmatpush2.msra.mxu0 0.0
  %73 = vmatprep.subr.mxu0 0.0
  %74 = vmatpush2.msra.mxu0 0.0
  %75 = vmatprep.subr.mxu0 0.0
  %76 = vmatpush2.msra.mxu0 0.0
  %77 = vmatprep.subr.mxu0 0.0
  %78 = vmatpush2.msra.mxu0 0.0
  %79 = vmatprep.subr.mxu0 0.0
  %80 = vmatpush2.msra.mxu0 0.0
  %81 = vmatprep.subr.mxu0 0.0
  %82 = vmatpush2.msra.mxu0 0.0
  %83 = vmatprep.subr.mxu0 0.0
  %84 = vmatpush2.msra.mxu0 0.0
  %85 = vmatprep.subr.mxu0 0.0
  %86 = vmatpush2.msra.mxu0 0.0
  %87 = vmatprep.subr.mxu0 0.0
  %88 = vmatpush2.msra.mxu0 0.0
  %89 = vmatprep.subr.mxu0 0.0
  %90 = vmatpush2.msra.mxu0 0.0
  %91 = vmatprep.subr.mxu0 0.0
  %92 = vmatpush2.msra.mxu0 0.0
  %93 = vmatprep.subr.mxu0 0.0
  %94 = vmatpush2.msra.mxu0 0.0
  %95 = vmatprep.mubr.f32.mxu0 0.0
  %96 = vmatmul.mubr.f32.gmra.mxu0 %v22
  %v97 = vpop.f32.mrf.mxu0
  %v98 = vadd.f32 0.0, %v97
  %v99 = vpop.f32.mrf.mxu0
  %100 = vmatprep.mubr.f32.mxu0 0.0
  %101 = vmatmul.mubr.f32.gmra.mxu0 %v25
  %v102 = vpop.f32.mrf.mxu0
  %v103 = vadd.f32 0.0, %v102
  %v104 = vpop.f32.mrf.mxu0
  %105 = vdwg.mxu0
  %v106 = vld [vmem:[%s2] sm:$0xff]
  %v107 = vld [vmem:[%s3] sm:$0xff]
  %v108 = vmul.f32 %v98, %v106
  %110 = vrot.lane.b32.xlu0 %v107, 15
  %v111 = vpop.permute.xlu0 %110
  %v113 = vmul.f32 %v98, %v111
  %115 = vrot.lane.b32.xlu0 %v113, 113
  %v116 = vpop.permute.xlu0 %115
  %v118 = vadd.f32 %v108, %v116
  %120 = vrot.lane.b32.xlu0 %v106, 30
  %v121 = vpop.permute.xlu0 %120
  %v123 = vmul.f32 %v98, %v121
  %124 = vrot.lane.b32.xlu0 %v107, 45
  %v125 = vpop.permute.xlu0 %124
  %v127 = vmul.f32 %v98, %v125
  %129 = vrot.lane.b32.xlu0 %v127, 113
  %v130 = vpop.permute.xlu0 %129
  %v132 = vadd.f32 %v123, %v130
  %134 = vrot.lane.b32.xlu0 %v132, 98
  %v135 = vpop.permute.xlu0 %134
  %vm136 = vcmask 39936
  %v138 = vsel %vm136, %v118, 0
  %v140 = vsel %vm136, %v135, 0
  %142 = vmatprep.subr.mxu0 0.0
  %143 = vmatpush1.xpose.msra.mxu0 0.0
  %144 = vmatprep.subr.mxu0 0.0
  %145 = vmatpush1.xpose.msra.mxu0 0.0
  %146 = vmatprep.subr.mxu0 0.0
  %147 = vmatpush1.xpose.msra.mxu0 0.0
  %148 = vmatprep.subr.mxu0 0.0
  %149 = vmatpush1.xpose.msra.mxu0 0.0
  %150 = vmatprep.subr.mxu0 0.0
  %151 = vmatpush1.xpose.msra.mxu0 0.0
  %152 = vmatprep.subr.mxu0 0.0
  %153 = vmatpush1.xpose.msra.mxu0 0.0
  %154 = vmatprep.subr.mxu0 0.0
  %155 = vmatpush1.xpose.msra.mxu0 0.0
  %156 = vmatprep.subr.mxu0 0.0
  %157 = vmatpush1.xpose.msra.mxu0 0.0
  %158 = vmatprep.subr.mxu0 0.0
  %159 = vmatpush1.xpose.msra.mxu0 0.0
  %160 = vmatprep.subr.mxu0 0.0
  %161 = vmatpush1.xpose.msra.mxu0 0.0
  %162 = vmatprep.subr.mxu0 0.0
  %163 = vmatpush1.xpose.msra.mxu0 0.0
  %164 = vmatprep.subr.mxu0 0.0
  %165 = vmatpush1.xpose.msra.mxu0 0.0
  %166 = vmatprep.subr.mxu0 0.0
  %167 = vmatpush1.xpose.msra.mxu0 0.0
  %168 = vmatprep.subr.mxu0 0.0
  %169 = vmatpush1.xpose.msra.mxu0 0.0
  %170 = vmatprep.subr.mxu0 0.0
  %171 = vmatpush1.xpose.msra.mxu0 0.0
  %172 = vmatprep.subr.mxu0 0.0
  %173 = vmatpush1.xpose.msra.mxu0 %v140
  %174 = vmatprep.subr.mxu0 0.0
  %175 = vmatpush2.xpose.msra.mxu0 0.0
  %176 = vmatprep.subr.mxu0 0.0
  %177 = vmatpush2.xpose.msra.mxu0 0.0
  %178 = vmatprep.subr.mxu0 0.0
  %179 = vmatpush2.xpose.msra.mxu0 0.0
  %180 = vmatprep.subr.mxu0 0.0
  %181 = vmatpush2.xpose.msra.mxu0 0.0
  %182 = vmatprep.subr.mxu0 0.0
  %183 = vmatpush2.xpose.msra.mxu0 0.0
  %184 = vmatprep.subr.mxu0 0.0
  %185 = vmatpush2.xpose.msra.mxu0 0.0
  %186 = vmatprep.subr.mxu0 0.0
  %187 = vmatpush2.xpose.msra.mxu0 0.0
  %188 = vmatprep.subr.mxu0 0.0
  %189 = vmatpush2.xpose.msra.mxu0 0.0
  %190 = vmatprep.subr.mxu0 0.0
  %191 = vmatpush2.xpose.msra.mxu0 0.0
  %192 = vmatprep.subr.mxu0 0.0
  %193 = vmatpush2.xpose.msra.mxu0 0.0
  %194 = vmatprep.subr.mxu0 0.0
  %195 = vmatpush2.xpose.msra.mxu0 0.0
  %196 = vmatprep.subr.mxu0 0.0
  %197 = vmatpush2.xpose.msra.mxu0 0.0
  %198 = vmatprep.subr.mxu0 0.0
  %199 = vmatpush2.xpose.msra.mxu0 0.0
  %200 = vmatprep.subr.mxu0 0.0
  %201 = vmatpush2.xpose.msra.mxu0 0.0
  %202 = vmatprep.subr.mxu0 0.0
  %203 = vmatpush2.xpose.msra.mxu0 0.0
  %204 = vmatprep.subr.mxu0 0.0
  %205 = vmatpush2.xpose.msra.mxu0 0.0
  %206 = vmatprep.mubr.f32.mxu0 0.0
  %207 = vmatmul.mubr.f32.gmra.mxu0 %v138
  %v208 = vpop.f32.mrf.mxu0
  %v209 = vadd.f32 0.0, %v208
  %v210 = vpop.f32.mrf.mxu0
  %211 = vdwg.mxu0
  %v212 = vmul.f32 %v209, 0.4472136
  %vm213 = vcmask 64512
  %v214 = vsel %vm213, %v212, -inf
  %215 = vmax.xlane.f32.xlu0 %v214
  %v216 = vpop.xlane.xlu0 %215
  %v217 = vsub.f32 %v212, %v216
  %v218 = vmul.f32 %v217, 1.442695
  %v219 = vpow.pop %v218
  %v220 = vsel %vm213, %v219, 0.0
  %221 = vadd.xlane.f32.xlu0 %v220
  %v222 = vpop.xlane.xlu0 %221
  %v223 = vrcp.pop %v222
  %v224 = vmul.f32 %v219, %v223
  %225 = vrot.lane.b32.xlu0 %v118, 123
  %v226 = vpop.permute.xlu0 %225
  %227 = vrot.lane.b32.xlu0 %v132, 93
  %v228 = vpop.permute.xlu0 %227
  %v229 = vsel %vm136, %v226, 0
  %v231 = vsel %vm136, %v228, 0
  %233 = vmatprep.subr.mxu0 0.0
  %234 = vmatpush1.xpose.msra.mxu0 0.0
  %235 = vmatprep.subr.mxu0 0.0
  %236 = vmatpush1.xpose.msra.mxu0 0.0
  %237 = vmatprep.subr.mxu0 0.0
  %238 = vmatpush1.xpose.msra.mxu0 0.0
  %239 = vmatprep.subr.mxu0 0.0
  %240 = vmatpush1.xpose.msra.mxu0 0.0
  %241 = vmatprep.subr.mxu0 0.0
  %242 = vmatpush1.xpose.msra.mxu0 0.0
  %243 = vmatprep.subr.mxu0 0.0
  %244 = vmatpush1.xpose.msra.mxu0 0.0
  %245 = vmatprep.subr.mxu0 0.0
  %246 = vmatpush1.xpose.msra.mxu0 0.0
  %247 = vmatprep.subr.mxu0 0.0
  %248 = vmatpush1.xpose.msra.mxu0 0.0
  %249 = vmatprep.subr.mxu0 0.0
  %250 = vmatpush1.xpose.msra.mxu0 0.0
  %251 = vmatprep.subr.mxu0 0.0
  %252 = vmatpush1.xpose.msra.mxu0 0.0
  %253 = vmatprep.subr.mxu0 0.0
  %254 = vmatpush1.xpose.msra.mxu0 0.0
  %255 = vmatprep.subr.mxu0 0.0
  %256 = vmatpush1.xpose.msra.mxu0 0.0
  %257 = vmatprep.subr.mxu0 0.0
  %258 = vmatpush1.xpose.msra.mxu0 0.0
  %259 = vmatprep.subr.mxu0 0.0
  %260 = vmatpush1.xpose.msra.mxu0 0.0
  %261 = vmatprep.subr.mxu0 0.0
  %262 = vmatpush1.xpose.msra.mxu0 0.0
  %263 = vmatprep.subr.mxu0 0.0
  %264 = vmatpush1.xpose.msra.mxu0 %v231
  %265 = vmatprep.subr.mxu0 0.0
  %266 = vmatpush2.xpose.msra.mxu0 0.0
  %267 = vmatprep.subr.mxu0 0.0
  %268 = vmatpush2.xpose.msra.mxu0 0.0
  %269 = vmatprep.subr.mxu0 0.0
  %270 = vmatpush2.xpose.msra.mxu0 0.0
  %271 = vmatprep.subr.mxu0 0.0
  %272 = vmatpush2.xpose.msra.mxu0 0.0
  %273 = vmatprep.subr.mxu0 0.0
  %274 = vmatpush2.xpose.msra.mxu0 0.0
  %275 = vmatprep.subr.mxu0 0.0
  %276 = vmatpush2.xpose.msra.mxu0 0.0
  %277 = vmatprep.subr.mxu0 0.0
  %278 = vmatpush2.xpose.msra.mxu0 0.0
  %279 = vmatprep.subr.mxu0 0.0
  %280 = vmatpush2.xpose.msra.mxu0 0.0
  %281 = vmatprep.subr.mxu0 0.0
  %282 = vmatpush2.xpose.msra.mxu0 0.0
  %283 = vmatprep.subr.mxu0 0.0
  %284 = vmatpush2.xpose.msra.mxu0 0.0
  %285 = vmatprep.subr.mxu0 0.0
  %286 = vmatpush2.xpose.msra.mxu0 0.0
  %287 = vmatprep.subr.mxu0 0.0
  %288 = vmatpush2.xpose.msra.mxu0 0.0
  %289 = vmatprep.subr.mxu0 0.0
  %290 = vmatpush2.xpose.msra.mxu0 0.0
  %291 = vmatprep.subr.mxu0 0.0
  %292 = vmatpush2.xpose.msra.mxu0 0.0
  %293 = vmatprep.subr.mxu0 0.0
  %294 = vmatpush2.xpose.msra.mxu0 0.0
  %295 = vmatprep.subr.mxu0 0.0
  %296 = vmatpush2.xpose.msra.mxu0 0.0
  %297 = vmatprep.mubr.f32.mxu0 0.0
  %298 = vmatmul.mubr.f32.gmra.mxu0 %v229
  %v299 = vpop.f32.mrf.mxu0
  %v300 = vadd.f32 0.0, %v299
  %v301 = vpop.f32.mrf.mxu0
  %302 = vdwg.mxu0
  %v303 = vmul.f32 %v300, 0.4472136
  %v304 = vsel %vm213, %v303, -inf
  %305 = vmax.xlane.f32.xlu0 %v304
  %v306 = vpop.xlane.xlu0 %305
  %v307 = vsub.f32 %v303, %v306
  %v308 = vmul.f32 %v307, 1.442695
  %v309 = vpow.pop %v308
  %v310 = vsel %vm213, %v309, 0.0
  %311 = vadd.xlane.f32.xlu0 %v310
  %v312 = vpop.xlane.xlu0 %311
  %v313 = vrcp.pop %v312
  %v314 = vmul.f32 %v309, %v313
  %316 = vrot.lane.b32.xlu0 %v98, 63
  %v317 = vpop.permute.xlu0 %316
  %v320 = vsel %vm213, %v314, 0
  %322 = vmatprep.subr.mxu0 0.0
  %323 = vmatpush1.msra.mxu0 0.0
  %324 = vmatprep.subr.mxu0 0.0
  %325 = vmatpush1.msra.mxu0 0.0
  %326 = vmatprep.subr.mxu0 0.0
  %327 = vmatpush1.msra.mxu0 0.0
  %328 = vmatprep.subr.mxu0 0.0
  %329 = vmatpush1.msra.mxu0 0.0
  %330 = vmatprep.subr.mxu0 0.0
  %331 = vmatpush1.msra.mxu0 0.0
  %332 = vmatprep.subr.mxu0 0.0
  %333 = vmatpush1.msra.mxu0 0.0
  %334 = vmatprep.subr.mxu0 0.0
  %335 = vmatpush1.msra.mxu0 0.0
  %336 = vmatprep.subr.mxu0 0.0
  %337 = vmatpush1.msra.mxu0 0.0
  %338 = vmatprep.subr.mxu0 0.0
  %339 = vmatpush1.msra.mxu0 0.0
  %340 = vmatprep.subr.mxu0 0.0
  %341 = vmatpush1.msra.mxu0 0.0
  %342 = vmatprep.subr.mxu0 0.0
  %343 = vmatpush1.msra.mxu0 0.0
  %344 = vmatprep.subr.mxu0 0.0
  %345 = vmatpush1.msra.mxu0 0.0
  %346 = vmatprep.subr.mxu0 0.0
  %347 = vmatpush1.msra.mxu0 0.0
  %348 = vmatprep.subr.mxu0 0.0
  %349 = vmatpush1.msra.mxu0 0.0
  %350 = vmatprep.subr.mxu0 0.0
  %351 = vmatpush1.msra.mxu0 0.0
  %352 = vmatprep.subr.mxu0 0.0
  %353 = vmatpush1.msra.mxu0 %v317
  %354 = vmatprep.subr.mxu0 0.0
  %355 = vmatpush2.msra.mxu0 0.0
  %356 = vmatprep.subr.mxu0 0.0
  %357 = vmatpush2.msra.mxu0 0.0
  %358 = vmatprep.subr.mxu0 0.0
  %359 = vmatpush2.msra.mxu0 0.0
  %360 = vmatprep.subr.mxu0 0.0
  %361 = vmatpush2.msra.mxu0 0.0
  %362 = vmatprep.subr.mxu0 0.0
  %363 = vmatpush2.msra.mxu0 0.0
  %364 = vmatprep.subr.mxu0 0.0
  %365 = vmatpush2.msra.mxu0 0.0
  %366 = vmatprep.subr.mxu0 0.0
  %367 = vmatpush2.msra.mxu0 0.0
  %368 = vmatprep.subr.mxu0 0.0
  %369 = vmatpush2.msra.mxu0 0.0
  %370 = vmatprep.subr.mxu0 0.0
  %371 = vmatpush2.msra.mxu0 0.0
  %372 = vmatprep.subr.mxu0 0.0
  %373 = vmatpush2.msra.mxu0 0.0
  %374 = vmatprep.subr.mxu0 0.0
  %375 = vmatpush2.msra.mxu0 0.0
  %376 = vmatprep.subr.mxu0 0.0
  %377 = vmatpush2.msra.mxu0 0.0
  %378 = vmatprep.subr.mxu0 0.0
  %379 = vmatpush2.msra.mxu0 0.0
  %380 = vmatprep.subr.mxu0 0.0
  %381 = vmatpush2.msra.mxu0 0.0
  %382 = vmatprep.subr.mxu0 0.0
  %383 = vmatpush2.msra.mxu0 0.0
  %384 = vmatprep.subr.mxu0 0.0
  %385 = vmatpush2.msra.mxu0 0.0
  %386 = vmatprep.mubr.f32.mxu0 0.0
  %387 = vmatmul.mubr.f32.gmra.mxu0 %v320
  %v388 = vpop.f32.mrf.mxu0
  %v389 = vadd.f32 0.0, %v388
  %v390 = vpop.f32.mrf.mxu0
  %391 = vdwg.mxu0
  %392 = vrot.lane.b32.xlu0 %v98, 68
  %v393 = vpop.permute.xlu0 %392
  %v396 = vsel %vm213, %v224, 0
  %398 = vmatprep.subr.mxu0 0.0
  %399 = vmatpush1.msra.mxu0 0.0
  %400 = vmatprep.subr.mxu0 0.0
  %401 = vmatpush1.msra.mxu0 0.0
  %402 = vmatprep.subr.mxu0 0.0
  %403 = vmatpush1.msra.mxu0 0.0
  %404 = vmatprep.subr.mxu0 0.0
  %405 = vmatpush1.msra.mxu0 0.0
  %406 = vmatprep.subr.mxu0 0.0
  %407 = vmatpush1.msra.mxu0 0.0
  %408 = vmatprep.subr.mxu0 0.0
  %409 = vmatpush1.msra.mxu0 0.0
  %410 = vmatprep.subr.mxu0 0.0
  %411 = vmatpush1.msra.mxu0 0.0
  %412 = vmatprep.subr.mxu0 0.0
  %413 = vmatpush1.msra.mxu0 0.0
  %414 = vmatprep.subr.mxu0 0.0
  %415 = vmatpush1.msra.mxu0 0.0
  %416 = vmatprep.subr.mxu0 0.0
  %417 = vmatpush1.msra.mxu0 0.0
  %418 = vmatprep.subr.mxu0 0.0
  %419 = vmatpush1.msra.mxu0 0.0
  %420 = vmatprep.subr.mxu0 0.0
  %421 = vmatpush1.msra.mxu0 0.0
  %422 = vmatprep.subr.mxu0 0.0
  %423 = vmatpush1.msra.mxu0 0.0
  %424 = vmatprep.subr.mxu0 0.0
  %425 = vmatpush1.msra.mxu0 0.0
  %426 = vmatprep.subr.mxu0 0.0
  %427 = vmatpush1.msra.mxu0 0.0
  %428 = vmatprep.subr.mxu0 0.0
  %429 = vmatpush1.msra.mxu0 %v393
  %430 = vmatprep.subr.mxu0 0.0
  %431 = vmatpush2.msra.mxu0 0.0
  %432 = vmatprep.subr.mxu0 0.0
  %433 = vmatpush2.msra.mxu0 0.0
  %434 = vmatprep.subr.mxu0 0.0
  %435 = vmatpush2.msra.mxu0 0.0
  %436 = vmatprep.subr.mxu0 0.0
  %437 = vmatpush2.msra.mxu0 0.0
  %438 = vmatprep.subr.mxu0 0.0
  %439 = vmatpush2.msra.mxu0 0.0
  %440 = vmatprep.subr.mxu0 0.0
  %441 = vmatpush2.msra.mxu0 0.0
  %442 = vmatprep.subr.mxu0 0.0
  %443 = vmatpush2.msra.mxu0 0.0
  %444 = vmatprep.subr.mxu0 0.0
  %445 = vmatpush2.msra.mxu0 0.0
  %446 = vmatprep.subr.mxu0 0.0
  %447 = vmatpush2.msra.mxu0 0.0
  %448 = vmatprep.subr.mxu0 0.0
  %449 = vmatpush2.msra.mxu0 0.0
  %450 = vmatprep.subr.mxu0 0.0
  %451 = vmatpush2.msra.mxu0 0.0
  %452 = vmatprep.subr.mxu0 0.0
  %453 = vmatpush2.msra.mxu0 0.0
  %454 = vmatprep.subr.mxu0 0.0
  %455 = vmatpush2.msra.mxu0 0.0
  %456 = vmatprep.subr.mxu0 0.0
  %457 = vmatpush2.msra.mxu0 0.0
  %458 = vmatprep.subr.mxu0 0.0
  %459 = vmatpush2.msra.mxu0 0.0
  %460 = vmatprep.subr.mxu0 0.0
  %461 = vmatpush2.msra.mxu0 0.0
  %462 = vmatprep.mubr.f32.mxu0 0.0
  %463 = vmatmul.mubr.f32.gmra.mxu0 %v396
  %v464 = vpop.f32.mrf.mxu0
  %v465 = vadd.f32 %v389, %v464
  %v466 = vpop.f32.mrf.mxu0
  %467 = vdwg.mxu0
  %468 = vrot.lane.b32.xlu0 %v118, 118
  %v469 = vpop.permute.xlu0 %468
  %470 = vrot.lane.b32.xlu0 %v132, 88
  %v471 = vpop.permute.xlu0 %470
  %v472 = vsel %vm136, %v469, 0
  %v474 = vsel %vm136, %v471, 0
  %476 = vmatprep.subr.mxu0 0.0
  %477 = vmatpush1.xpose.msra.mxu0 0.0
  %478 = vmatprep.subr.mxu0 0.0
  %479 = vmatpush1.xpose.msra.mxu0 0.0
  %480 = vmatprep.subr.mxu0 0.0
  %481 = vmatpush1.xpose.msra.mxu0 0.0
  %482 = vmatprep.subr.mxu0 0.0
  %483 = vmatpush1.xpose.msra.mxu0 0.0
  %484 = vmatprep.subr.mxu0 0.0
  %485 = vmatpush1.xpose.msra.mxu0 0.0
  %486 = vmatprep.subr.mxu0 0.0
  %487 = vmatpush1.xpose.msra.mxu0 0.0
  %488 = vmatprep.subr.mxu0 0.0
  %489 = vmatpush1.xpose.msra.mxu0 0.0
  %490 = vmatprep.subr.mxu0 0.0
  %491 = vmatpush1.xpose.msra.mxu0 0.0
  %492 = vmatprep.subr.mxu0 0.0
  %493 = vmatpush1.xpose.msra.mxu0 0.0
  %494 = vmatprep.subr.mxu0 0.0
  %495 = vmatpush1.xpose.msra.mxu0 0.0
  %496 = vmatprep.subr.mxu0 0.0
  %497 = vmatpush1.xpose.msra.mxu0 0.0
  %498 = vmatprep.subr.mxu0 0.0
  %499 = vmatpush1.xpose.msra.mxu0 0.0
  %500 = vmatprep.subr.mxu0 0.0
  %501 = vmatpush1.xpose.msra.mxu0 0.0
  %502 = vmatprep.subr.mxu0 0.0
  %503 = vmatpush1.xpose.msra.mxu0 0.0
  %504 = vmatprep.subr.mxu0 0.0
  %505 = vmatpush1.xpose.msra.mxu0 0.0
  %506 = vmatprep.subr.mxu0 0.0
  %507 = vmatpush1.xpose.msra.mxu0 %v474
  %508 = vmatprep.subr.mxu0 0.0
  %509 = vmatpush2.xpose.msra.mxu0 0.0
  %510 = vmatprep.subr.mxu0 0.0
  %511 = vmatpush2.xpose.msra.mxu0 0.0
  %512 = vmatprep.subr.mxu0 0.0
  %513 = vmatpush2.xpose.msra.mxu0 0.0
  %514 = vmatprep.subr.mxu0 0.0
  %515 = vmatpush2.xpose.msra.mxu0 0.0
  %516 = vmatprep.subr.mxu0 0.0
  %517 = vmatpush2.xpose.msra.mxu0 0.0
  %518 = vmatprep.subr.mxu0 0.0
  %519 = vmatpush2.xpose.msra.mxu0 0.0
  %520 = vmatprep.subr.mxu0 0.0
  %521 = vmatpush2.xpose.msra.mxu0 0.0
  %522 = vmatprep.subr.mxu0 0.0
  %523 = vmatpush2.xpose.msra.mxu0 0.0
  %524 = vmatprep.subr.mxu0 0.0
  %525 = vmatpush2.xpose.msra.mxu0 0.0
  %526 = vmatprep.subr.mxu0 0.0
  %527 = vmatpush2.xpose.msra.mxu0 0.0
  %528 = vmatprep.subr.mxu0 0.0
  %529 = vmatpush2.xpose.msra.mxu0 0.0
  %530 = vmatprep.subr.mxu0 0.0
  %531 = vmatpush2.xpose.msra.mxu0 0.0
  %532 = vmatprep.subr.mxu0 0.0
  %533 = vmatpush2.xpose.msra.mxu0 0.0
  %534 = vmatprep.subr.mxu0 0.0
  %535 = vmatpush2.xpose.msra.mxu0 0.0
  %536 = vmatprep.subr.mxu0 0.0
  %537 = vmatpush2.xpose.msra.mxu0 0.0
  %538 = vmatprep.subr.mxu0 0.0
  %539 = vmatpush2.xpose.msra.mxu0 0.0
  %540 = vmatprep.mubr.f32.mxu0 0.0
  %541 = vmatmul.mubr.f32.gmra.mxu0 %v472
  %v542 = vpop.f32.mrf.mxu0
  %v543 = vadd.f32 0.0, %v542
  %v544 = vpop.f32.mrf.mxu0
  %545 = vdwg.mxu0
  %v546 = vmul.f32 %v543, 0.4472136
  %v547 = vsel %vm213, %v546, -inf
  %548 = vmax.xlane.f32.xlu0 %v547
  %v549 = vpop.xlane.xlu0 %548
  %v550 = vsub.f32 %v546, %v549
  %v551 = vmul.f32 %v550, 1.442695
  %v552 = vpow.pop %v551
  %v553 = vsel %vm213, %v552, 0.0
  %554 = vadd.xlane.f32.xlu0 %v553
  %v555 = vpop.xlane.xlu0 %554
  %v556 = vrcp.pop %v555
  %v557 = vmul.f32 %v552, %v556
  %558 = vrot.lane.b32.xlu0 %v98, 58
  %v559 = vpop.permute.xlu0 %558
  %v562 = vsel %vm213, %v557, 0
  %564 = vmatprep.subr.mxu0 0.0
  %565 = vmatpush1.msra.mxu0 0.0
  %566 = vmatprep.subr.mxu0 0.0
  %567 = vmatpush1.msra.mxu0 0.0
  %568 = vmatprep.subr.mxu0 0.0
  %569 = vmatpush1.msra.mxu0 0.0
  %570 = vmatprep.subr.mxu0 0.0
  %571 = vmatpush1.msra.mxu0 0.0
  %572 = vmatprep.subr.mxu0 0.0
  %573 = vmatpush1.msra.mxu0 0.0
  %574 = vmatprep.subr.mxu0 0.0
  %575 = vmatpush1.msra.mxu0 0.0
  %576 = vmatprep.subr.mxu0 0.0
  %577 = vmatpush1.msra.mxu0 0.0
  %578 = vmatprep.subr.mxu0 0.0
  %579 = vmatpush1.msra.mxu0 0.0
  %580 = vmatprep.subr.mxu0 0.0
  %581 = vmatpush1.msra.mxu0 0.0
  %582 = vmatprep.subr.mxu0 0.0
  %583 = vmatpush1.msra.mxu0 0.0
  %584 = vmatprep.subr.mxu0 0.0
  %585 = vmatpush1.msra.mxu0 0.0
  %586 = vmatprep.subr.mxu0 0.0
  %587 = vmatpush1.msra.mxu0 0.0
  %588 = vmatprep.subr.mxu0 0.0
  %589 = vmatpush1.msra.mxu0 0.0
  %590 = vmatprep.subr.mxu0 0.0
  %591 = vmatpush1.msra.mxu0 0.0
  %592 = vmatprep.subr.mxu0 0.0
  %593 = vmatpush1.msra.mxu0 0.0
  %594 = vmatprep.subr.mxu0 0.0
  %595 = vmatpush1.msra.mxu0 %v559
  %596 = vmatprep.subr.mxu0 0.0
  %597 = vmatpush2.msra.mxu0 0.0
  %598 = vmatprep.subr.mxu0 0.0
  %599 = vmatpush2.msra.mxu0 0.0
  %600 = vmatprep.subr.mxu0 0.0
  %601 = vmatpush2.msra.mxu0 0.0
  %602 = vmatprep.subr.mxu0 0.0
  %603 = vmatpush2.msra.mxu0 0.0
  %604 = vmatprep.subr.mxu0 0.0
  %605 = vmatpush2.msra.mxu0 0.0
  %606 = vmatprep.subr.mxu0 0.0
  %607 = vmatpush2.msra.mxu0 0.0
  %608 = vmatprep.subr.mxu0 0.0
  %609 = vmatpush2.msra.mxu0 0.0
  %610 = vmatprep.subr.mxu0 0.0
  %611 = vmatpush2.msra.mxu0 0.0
  %612 = vmatprep.subr.mxu0 0.0
  %613 = vmatpush2.msra.mxu0 0.0
  %614 = vmatprep.subr.mxu0 0.0
  %615 = vmatpush2.msra.mxu0 0.0
  %616 = vmatprep.subr.mxu0 0.0
  %617 = vmatpush2.msra.mxu0 0.0
  %618 = vmatprep.subr.mxu0 0.0
  %619 = vmatpush2.msra.mxu0 0.0
  %620 = vmatprep.subr.mxu0 0.0
  %621 = vmatpush2.msra.mxu0 0.0
  %622 = vmatprep.subr.mxu0 0.0
  %623 = vmatpush2.msra.mxu0 0.0
  %624 = vmatprep.subr.mxu0 0.0
  %625 = vmatpush2.msra.mxu0 0.0
  %626 = vmatprep.subr.mxu0 0.0
  %627 = vmatpush2.msra.mxu0 0.0
  %628 = vmatprep.mubr.f32.mxu0 0.0
  %629 = vmatmul.mubr.f32.gmra.mxu0 %v562
  %v630 = vpop.f32.mrf.mxu0
  %v631 = vadd.f32 0.0, %v630
  %v632 = vpop.f32.mrf.mxu0
  %633 = vdwg.mxu0
  %v634 = vadd.f32 %v465, %v631
  %635 = vst.msk [vmem:[%s4] sm:$0xff] %vm136, %v634
  %v636 = vmul.f32 %v103, %v106
  %v637 = vmul.f32 %v103, %v111
  %639 = vrot.lane.b32.xlu0 %v637, 113
  %v640 = vpop.permute.xlu0 %639
  %v642 = vadd.f32 %v636, %v640
  %v643 = vmul.f32 %v103, %v121
  %v644 = vmul.f32 %v103, %v125
  %646 = vrot.lane.b32.xlu0 %v644, 113
  %v647 = vpop.permute.xlu0 %646
  %v649 = vadd.f32 %v643, %v647
  %651 = vrot.lane.b32.xlu0 %v649, 98
  %v652 = vpop.permute.xlu0 %651
  %v654 = vsel %vm136, %v642, 0
  %v656 = vsel %vm136, %v652, 0
  %658 = vmatprep.subr.mxu0 0.0
  %659 = vmatpush1.xpose.msra.mxu0 0.0
  %660 = vmatprep.subr.mxu0 0.0
  %661 = vmatpush1.xpose.msra.mxu0 0.0
  %662 = vmatprep.subr.mxu0 0.0
  %663 = vmatpush1.xpose.msra.mxu0 0.0
  %664 = vmatprep.subr.mxu0 0.0
  %665 = vmatpush1.xpose.msra.mxu0 0.0
  %666 = vmatprep.subr.mxu0 0.0
  %667 = vmatpush1.xpose.msra.mxu0 0.0
  %668 = vmatprep.subr.mxu0 0.0
  %669 = vmatpush1.xpose.msra.mxu0 0.0
  %670 = vmatprep.subr.mxu0 0.0
  %671 = vmatpush1.xpose.msra.mxu0 0.0
  %672 = vmatprep.subr.mxu0 0.0
  %673 = vmatpush1.xpose.msra.mxu0 0.0
  %674 = vmatprep.subr.mxu0 0.0
  %675 = vmatpush1.xpose.msra.mxu0 0.0
  %676 = vmatprep.subr.mxu0 0.0
  %677 = vmatpush1.xpose.msra.mxu0 0.0
  %678 = vmatprep.subr.mxu0 0.0
  %679 = vmatpush1.xpose.msra.mxu0 0.0
  %680 = vmatprep.subr.mxu0 0.0
  %681 = vmatpush1.xpose.msra.mxu0 0.0
  %682 = vmatprep.subr.mxu0 0.0
  %683 = vmatpush1.xpose.msra.mxu0 0.0
  %684 = vmatprep.subr.mxu0 0.0
  %685 = vmatpush1.xpose.msra.mxu0 0.0
  %686 = vmatprep.subr.mxu0 0.0
  %687 = vmatpush1.xpose.msra.mxu0 0.0
  %688 = vmatprep.subr.mxu0 0.0
  %689 = vmatpush1.xpose.msra.mxu0 %v656
  %690 = vmatprep.subr.mxu0 0.0
  %691 = vmatpush2.xpose.msra.mxu0 0.0
  %692 = vmatprep.subr.mxu0 0.0
  %693 = vmatpush2.xpose.msra.mxu0 0.0
  %694 = vmatprep.subr.mxu0 0.0
  %695 = vmatpush2.xpose.msra.mxu0 0.0
  %696 = vmatprep.subr.mxu0 0.0
  %697 = vmatpush2.xpose.msra.mxu0 0.0
  %698 = vmatprep.subr.mxu0 0.0
  %699 = vmatpush2.xpose.msra.mxu0 0.0
  %700 = vmatprep.subr.mxu0 0.0
  %701 = vmatpush2.xpose.msra.mxu0 0.0
  %702 = vmatprep.subr.mxu0 0.0
  %703 = vmatpush2.xpose.msra.mxu0 0.0
  %704 = vmatprep.subr.mxu0 0.0
  %705 = vmatpush2.xpose.msra.mxu0 0.0
  %706 = vmatprep.subr.mxu0 0.0
  %707 = vmatpush2.xpose.msra.mxu0 0.0
  %708 = vmatprep.subr.mxu0 0.0
  %709 = vmatpush2.xpose.msra.mxu0 0.0
  %710 = vmatprep.subr.mxu0 0.0
  %711 = vmatpush2.xpose.msra.mxu0 0.0
  %712 = vmatprep.subr.mxu0 0.0
  %713 = vmatpush2.xpose.msra.mxu0 0.0
  %714 = vmatprep.subr.mxu0 0.0
  %715 = vmatpush2.xpose.msra.mxu0 0.0
  %716 = vmatprep.subr.mxu0 0.0
  %717 = vmatpush2.xpose.msra.mxu0 0.0
  %718 = vmatprep.subr.mxu0 0.0
  %719 = vmatpush2.xpose.msra.mxu0 0.0
  %720 = vmatprep.subr.mxu0 0.0
  %721 = vmatpush2.xpose.msra.mxu0 0.0
  %722 = vmatprep.mubr.f32.mxu0 0.0
  %723 = vmatmul.mubr.f32.gmra.mxu0 %v654
  %v724 = vpop.f32.mrf.mxu0
  %v725 = vadd.f32 0.0, %v724
  %v726 = vpop.f32.mrf.mxu0
  %727 = vdwg.mxu0
  %v728 = vmul.f32 %v725, 0.4472136
  %v729 = vsel %vm213, %v728, -inf
  %730 = vmax.xlane.f32.xlu0 %v729
  %v731 = vpop.xlane.xlu0 %730
  %v732 = vsub.f32 %v728, %v731
  %v733 = vmul.f32 %v732, 1.442695
  %v734 = vpow.pop %v733
  %v735 = vsel %vm213, %v734, 0.0
  %736 = vadd.xlane.f32.xlu0 %v735
  %v737 = vpop.xlane.xlu0 %736
  %v738 = vrcp.pop %v737
  %v739 = vmul.f32 %v734, %v738
  %740 = vrot.lane.b32.xlu0 %v642, 123
  %v741 = vpop.permute.xlu0 %740
  %742 = vrot.lane.b32.xlu0 %v649, 93
  %v743 = vpop.permute.xlu0 %742
  %v744 = vsel %vm136, %v741, 0
  %v746 = vsel %vm136, %v743, 0
  %748 = vmatprep.subr.mxu0 0.0
  %749 = vmatpush1.xpose.msra.mxu0 0.0
  %750 = vmatprep.subr.mxu0 0.0
  %751 = vmatpush1.xpose.msra.mxu0 0.0
  %752 = vmatprep.subr.mxu0 0.0
  %753 = vmatpush1.xpose.msra.mxu0 0.0
  %754 = vmatprep.subr.mxu0 0.0
  %755 = vmatpush1.xpose.msra.mxu0 0.0
  %756 = vmatprep.subr.mxu0 0.0
  %757 = vmatpush1.xpose.msra.mxu0 0.0
  %758 = vmatprep.subr.mxu0 0.0
  %759 = vmatpush1.xpose.msra.mxu0 0.0
  %760 = vmatprep.subr.mxu0 0.0
  %761 = vmatpush1.xpose.msra.mxu0 0.0
  %762 = vmatprep.subr.mxu0 0.0
  %763 = vmatpush1.xpose.msra.mxu0 0.0
  %764 = vmatprep.subr.mxu0 0.0
  %765 = vmatpush1.xpose.msra.mxu0 0.0
  %766 = vmatprep.subr.mxu0 0.0
  %767 = vmatpush1.xpose.msra.mxu0 0.0
  %768 = vmatprep.subr.mxu0 0.0
  %769 = vmatpush1.xpose.msra.mxu0 0.0
  %770 = vmatprep.subr.mxu0 0.0
  %771 = vmatpush1.xpose.msra.mxu0 0.0
  %772 = vmatprep.subr.mxu0 0.0
  %773 = vmatpush1.xpose.msra.mxu0 0.0
  %774 = vmatprep.subr.mxu0 0.0
  %775 = vmatpush1.xpose.msra.mxu0 0.0
  %776 = vmatprep.subr.mxu0 0.0
  %777 = vmatpush1.xpose.msra.mxu0 0.0
  %778 = vmatprep.subr.mxu0 0.0
  %779 = vmatpush1.xpose.msra.mxu0 %v746
  %780 = vmatprep.subr.mxu0 0.0
  %781 = vmatpush2.xpose.msra.mxu0 0.0
  %782 = vmatprep.subr.mxu0 0.0
  %783 = vmatpush2.xpose.msra.mxu0 0.0
  %784 = vmatprep.subr.mxu0 0.0
  %785 = vmatpush2.xpose.msra.mxu0 0.0
  %786 = vmatprep.subr.mxu0 0.0
  %787 = vmatpush2.xpose.msra.mxu0 0.0
  %788 = vmatprep.subr.mxu0 0.0
  %789 = vmatpush2.xpose.msra.mxu0 0.0
  %790 = vmatprep.subr.mxu0 0.0
  %791 = vmatpush2.xpose.msra.mxu0 0.0
  %792 = vmatprep.subr.mxu0 0.0
  %793 = vmatpush2.xpose.msra.mxu0 0.0
  %794 = vmatprep.subr.mxu0 0.0
  %795 = vmatpush2.xpose.msra.mxu0 0.0
  %796 = vmatprep.subr.mxu0 0.0
  %797 = vmatpush2.xpose.msra.mxu0 0.0
  %798 = vmatprep.subr.mxu0 0.0
  %799 = vmatpush2.xpose.msra.mxu0 0.0
  %800 = vmatprep.subr.mxu0 0.0
  %801 = vmatpush2.xpose.msra.mxu0 0.0
  %802 = vmatprep.subr.mxu0 0.0
  %803 = vmatpush2.xpose.msra.mxu0 0.0
  %804 = vmatprep.subr.mxu0 0.0
  %805 = vmatpush2.xpose.msra.mxu0 0.0
  %806 = vmatprep.subr.mxu0 0.0
  %807 = vmatpush2.xpose.msra.mxu0 0.0
  %808 = vmatprep.subr.mxu0 0.0
  %809 = vmatpush2.xpose.msra.mxu0 0.0
  %810 = vmatprep.subr.mxu0 0.0
  %811 = vmatpush2.xpose.msra.mxu0 0.0
  %812 = vmatprep.mubr.f32.mxu0 0.0
  %813 = vmatmul.mubr.f32.gmra.mxu0 %v744
  %v814 = vpop.f32.mrf.mxu0
  %v815 = vadd.f32 0.0, %v814
  %v816 = vpop.f32.mrf.mxu0
  %817 = vdwg.mxu0
  %v818 = vmul.f32 %v815, 0.4472136
  %v819 = vsel %vm213, %v818, -inf
  %820 = vmax.xlane.f32.xlu0 %v819
  %v821 = vpop.xlane.xlu0 %820
  %v822 = vsub.f32 %v818, %v821
  %v823 = vmul.f32 %v822, 1.442695
  %v824 = vpow.pop %v823
  %v825 = vsel %vm213, %v824, 0.0
  %826 = vadd.xlane.f32.xlu0 %v825
  %v827 = vpop.xlane.xlu0 %826
  %v828 = vrcp.pop %v827
  %v829 = vmul.f32 %v824, %v828
  %831 = vrot.lane.b32.xlu0 %v103, 63
  %v832 = vpop.permute.xlu0 %831
  %v835 = vsel %vm213, %v829, 0
  %837 = vmatprep.subr.mxu0 0.0
  %838 = vmatpush1.msra.mxu0 0.0
  %839 = vmatprep.subr.mxu0 0.0
  %840 = vmatpush1.msra.mxu0 0.0
  %841 = vmatprep.subr.mxu0 0.0
  %842 = vmatpush1.msra.mxu0 0.0
  %843 = vmatprep.subr.mxu0 0.0
  %844 = vmatpush1.msra.mxu0 0.0
  %845 = vmatprep.subr.mxu0 0.0
  %846 = vmatpush1.msra.mxu0 0.0
  %847 = vmatprep.subr.mxu0 0.0
  %848 = vmatpush1.msra.mxu0 0.0
  %849 = vmatprep.subr.mxu0 0.0
  %850 = vmatpush1.msra.mxu0 0.0
  %851 = vmatprep.subr.mxu0 0.0
  %852 = vmatpush1.msra.mxu0 0.0
  %853 = vmatprep.subr.mxu0 0.0
  %854 = vmatpush1.msra.mxu0 0.0
  %855 = vmatprep.subr.mxu0 0.0
  %856 = vmatpush1.msra.mxu0 0.0
  %857 = vmatprep.subr.mxu0 0.0
  %858 = vmatpush1.msra.mxu0 0.0
  %859 = vmatprep.subr.mxu0 0.0
  %860 = vmatpush1.msra.mxu0 0.0
  %861 = vmatprep.subr.mxu0 0.0
  %862 = vmatpush1.msra.mxu0 0.0
  %863 = vmatprep.subr.mxu0 0.0
  %864 = vmatpush1.msra.mxu0 0.0
  %865 = vmatprep.subr.mxu0 0.0
  %866 = vmatpush1.msra.mxu0 0.0
  %867 = vmatprep.subr.mxu0 0.0
  %868 = vmatpush1.msra.mxu0 %v832
  %869 = vmatprep.subr.mxu0 0.0
  %870 = vmatpush2.msra.mxu0 0.0
  %871 = vmatprep.subr.mxu0 0.0
  %872 = vmatpush2.msra.mxu0 0.0
  %873 = vmatprep.subr.mxu0 0.0
  %874 = vmatpush2.msra.mxu0 0.0
  %875 = vmatprep.subr.mxu0 0.0
  %876 = vmatpush2.msra.mxu0 0.0
  %877 = vmatprep.subr.mxu0 0.0
  %878 = vmatpush2.msra.mxu0 0.0
  %879 = vmatprep.subr.mxu0 0.0
  %880 = vmatpush2.msra.mxu0 0.0
  %881 = vmatprep.subr.mxu0 0.0
  %882 = vmatpush2.msra.mxu0 0.0
  %883 = vmatprep.subr.mxu0 0.0
  %884 = vmatpush2.msra.mxu0 0.0
  %885 = vmatprep.subr.mxu0 0.0
  %886 = vmatpush2.msra.mxu0 0.0
  %887 = vmatprep.subr.mxu0 0.0
  %888 = vmatpush2.msra.mxu0 0.0
  %889 = vmatprep.subr.mxu0 0.0
  %890 = vmatpush2.msra.mxu0 0.0
  %891 = vmatprep.subr.mxu0 0.0
  %892 = vmatpush2.msra.mxu0 0.0
  %893 = vmatprep.subr.mxu0 0.0
  %894 = vmatpush2.msra.mxu0 0.0
  %895 = vmatprep.subr.mxu0 0.0
  %896 = vmatpush2.msra.mxu0 0.0
  %897 = vmatprep.subr.mxu0 0.0
  %898 = vmatpush2.msra.mxu0 0.0
  %899 = vmatprep.subr.mxu0 0.0
  %900 = vmatpush2.msra.mxu0 0.0
  %901 = vmatprep.mubr.f32.mxu0 0.0
  %902 = vmatmul.mubr.f32.gmra.mxu0 %v835
  %v903 = vpop.f32.mrf.mxu0
  %v904 = vadd.f32 0.0, %v903
  %v905 = vpop.f32.mrf.mxu0
  %906 = vdwg.mxu0
  %907 = vrot.lane.b32.xlu0 %v103, 68
  %v908 = vpop.permute.xlu0 %907
  %v911 = vsel %vm213, %v739, 0
  %913 = vmatprep.subr.mxu0 0.0
  %914 = vmatpush1.msra.mxu0 0.0
  %915 = vmatprep.subr.mxu0 0.0
  %916 = vmatpush1.msra.mxu0 0.0
  %917 = vmatprep.subr.mxu0 0.0
  %918 = vmatpush1.msra.mxu0 0.0
  %919 = vmatprep.subr.mxu0 0.0
  %920 = vmatpush1.msra.mxu0 0.0
  %921 = vmatprep.subr.mxu0 0.0
  %922 = vmatpush1.msra.mxu0 0.0
  %923 = vmatprep.subr.mxu0 0.0
  %924 = vmatpush1.msra.mxu0 0.0
  %925 = vmatprep.subr.mxu0 0.0
  %926 = vmatpush1.msra.mxu0 0.0
  %927 = vmatprep.subr.mxu0 0.0
  %928 = vmatpush1.msra.mxu0 0.0
  %929 = vmatprep.subr.mxu0 0.0
  %930 = vmatpush1.msra.mxu0 0.0
  %931 = vmatprep.subr.mxu0 0.0
  %932 = vmatpush1.msra.mxu0 0.0
  %933 = vmatprep.subr.mxu0 0.0
  %934 = vmatpush1.msra.mxu0 0.0
  %935 = vmatprep.subr.mxu0 0.0
  %936 = vmatpush1.msra.mxu0 0.0
  %937 = vmatprep.subr.mxu0 0.0
  %938 = vmatpush1.msra.mxu0 0.0
  %939 = vmatprep.subr.mxu0 0.0
  %940 = vmatpush1.msra.mxu0 0.0
  %941 = vmatprep.subr.mxu0 0.0
  %942 = vmatpush1.msra.mxu0 0.0
  %943 = vmatprep.subr.mxu0 0.0
  %944 = vmatpush1.msra.mxu0 %v908
  %945 = vmatprep.subr.mxu0 0.0
  %946 = vmatpush2.msra.mxu0 0.0
  %947 = vmatprep.subr.mxu0 0.0
  %948 = vmatpush2.msra.mxu0 0.0
  %949 = vmatprep.subr.mxu0 0.0
  %950 = vmatpush2.msra.mxu0 0.0
  %951 = vmatprep.subr.mxu0 0.0
  %952 = vmatpush2.msra.mxu0 0.0
  %953 = vmatprep.subr.mxu0 0.0
  %954 = vmatpush2.msra.mxu0 0.0
  %955 = vmatprep.subr.mxu0 0.0
  %956 = vmatpush2.msra.mxu0 0.0
  %957 = vmatprep.subr.mxu0 0.0
  %958 = vmatpush2.msra.mxu0 0.0
  %959 = vmatprep.subr.mxu0 0.0
  %960 = vmatpush2.msra.mxu0 0.0
  %961 = vmatprep.subr.mxu0 0.0
  %962 = vmatpush2.msra.mxu0 0.0
  %963 = vmatprep.subr.mxu0 0.0
  %964 = vmatpush2.msra.mxu0 0.0
  %965 = vmatprep.subr.mxu0 0.0
  %966 = vmatpush2.msra.mxu0 0.0
  %967 = vmatprep.subr.mxu0 0.0
  %968 = vmatpush2.msra.mxu0 0.0
  %969 = vmatprep.subr.mxu0 0.0
  %970 = vmatpush2.msra.mxu0 0.0
  %971 = vmatprep.subr.mxu0 0.0
  %972 = vmatpush2.msra.mxu0 0.0
  %973 = vmatprep.subr.mxu0 0.0
  %974 = vmatpush2.msra.mxu0 0.0
  %975 = vmatprep.subr.mxu0 0.0
  %976 = vmatpush2.msra.mxu0 0.0
  %977 = vmatprep.mubr.f32.mxu0 0.0
  %978 = vmatmul.mubr.f32.gmra.mxu0 %v911
  %v979 = vpop.f32.mrf.mxu0
  %v980 = vadd.f32 %v904, %v979
  %v981 = vpop.f32.mrf.mxu0
  %982 = vdwg.mxu0
  %983 = vrot.lane.b32.xlu0 %v642, 118
  %v984 = vpop.permute.xlu0 %983
  %985 = vrot.lane.b32.xlu0 %v649, 88
  %v986 = vpop.permute.xlu0 %985
  %v987 = vsel %vm136, %v984, 0
  %v989 = vsel %vm136, %v986, 0
  %991 = vmatprep.subr.mxu0 0.0
  %992 = vmatpush1.xpose.msra.mxu0 0.0
  %993 = vmatprep.subr.mxu0 0.0
  %994 = vmatpush1.xpose.msra.mxu0 0.0
  %995 = vmatprep.subr.mxu0 0.0
  %996 = vmatpush1.xpose.msra.mxu0 0.0
  %997 = vmatprep.subr.mxu0 0.0
  %998 = vmatpush1.xpose.msra.mxu0 0.0
  %999 = vmatprep.subr.mxu0 0.0
  %1000 = vmatpush1.xpose.msra.mxu0 0.0
  %1001 = vmatprep.subr.mxu0 0.0
  %1002 = vmatpush1.xpose.msra.mxu0 0.0
  %1003 = vmatprep.subr.mxu0 0.0
  %1004 = vmatpush1.xpose.msra.mxu0 0.0
  %1005 = vmatprep.subr.mxu0 0.0
  %1006 = vmatpush1.xpose.msra.mxu0 0.0
  %1007 = vmatprep.subr.mxu0 0.0
  %1008 = vmatpush1.xpose.msra.mxu0 0.0
  %1009 = vmatprep.subr.mxu0 0.0
  %1010 = vmatpush1.xpose.msra.mxu0 0.0
  %1011 = vmatprep.subr.mxu0 0.0
  %1012 = vmatpush1.xpose.msra.mxu0 0.0
  %1013 = vmatprep.subr.mxu0 0.0
  %1014 = vmatpush1.xpose.msra.mxu0 0.0
  %1015 = vmatprep.subr.mxu0 0.0
  %1016 = vmatpush1.xpose.msra.mxu0 0.0
  %1017 = vmatprep.subr.mxu0 0.0
  %1018 = vmatpush1.xpose.msra.mxu0 0.0
  %1019 = vmatprep.subr.mxu0 0.0
  %1020 = vmatpush1.xpose.msra.mxu0 0.0
  %1021 = vmatprep.subr.mxu0 0.0
  %1022 = vmatpush1.xpose.msra.mxu0 %v989
  %1023 = vmatprep.subr.mxu0 0.0
  %1024 = vmatpush2.xpose.msra.mxu0 0.0
  %1025 = vmatprep.subr.mxu0 0.0
  %1026 = vmatpush2.xpose.msra.mxu0 0.0
  %1027 = vmatprep.subr.mxu0 0.0
  %1028 = vmatpush2.xpose.msra.mxu0 0.0
  %1029 = vmatprep.subr.mxu0 0.0
  %1030 = vmatpush2.xpose.msra.mxu0 0.0
  %1031 = vmatprep.subr.mxu0 0.0
  %1032 = vmatpush2.xpose.msra.mxu0 0.0
  %1033 = vmatprep.subr.mxu0 0.0
  %1034 = vmatpush2.xpose.msra.mxu0 0.0
  %1035 = vmatprep.subr.mxu0 0.0
  %1036 = vmatpush2.xpose.msra.mxu0 0.0
  %1037 = vmatprep.subr.mxu0 0.0
  %1038 = vmatpush2.xpose.msra.mxu0 0.0
  %1039 = vmatprep.subr.mxu0 0.0
  %1040 = vmatpush2.xpose.msra.mxu0 0.0
  %1041 = vmatprep.subr.mxu0 0.0
  %1042 = vmatpush2.xpose.msra.mxu0 0.0
  %1043 = vmatprep.subr.mxu0 0.0
  %1044 = vmatpush2.xpose.msra.mxu0 0.0
  %1045 = vmatprep.subr.mxu0 0.0
  %1046 = vmatpush2.xpose.msra.mxu0 0.0
  %1047 = vmatprep.subr.mxu0 0.0
  %1048 = vmatpush2.xpose.msra.mxu0 0.0
  %1049 = vmatprep.subr.mxu0 0.0
  %1050 = vmatpush2.xpose.msra.mxu0 0.0
  %1051 = vmatprep.subr.mxu0 0.0
  %1052 = vmatpush2.xpose.msra.mxu0 0.0
  %1053 = vmatprep.subr.mxu0 0.0
  %1054 = vmatpush2.xpose.msra.mxu0 0.0
  %1055 = vmatprep.mubr.f32.mxu0 0.0
  %1056 = vmatmul.mubr.f32.gmra.mxu0 %v987
  %v1057 = vpop.f32.mrf.mxu0
  %v1058 = vadd.f32 0.0, %v1057
  %v1059 = vpop.f32.mrf.mxu0
  %1060 = vdwg.mxu0
  %v1061 = vmul.f32 %v1058, 0.4472136
  %v1062 = vsel %vm213, %v1061, -inf
  %1063 = vmax.xlane.f32.xlu0 %v1062
  %v1064 = vpop.xlane.xlu0 %1063
  %v1065 = vsub.f32 %v1061, %v1064
  %v1066 = vmul.f32 %v1065, 1.442695
  %v1067 = vpow.pop %v1066
  %v1068 = vsel %vm213, %v1067, 0.0
  %1069 = vadd.xlane.f32.xlu0 %v1068
  %v1070 = vpop.xlane.xlu0 %1069
  %v1071 = vrcp.pop %v1070
  %v1072 = vmul.f32 %v1067, %v1071
  %1073 = vrot.lane.b32.xlu0 %v103, 58
  %v1074 = vpop.permute.xlu0 %1073
  %v1077 = vsel %vm213, %v1072, 0
  %1079 = vmatprep.subr.mxu0 0.0
  %1080 = vmatpush1.msra.mxu0 0.0
  %1081 = vmatprep.subr.mxu0 0.0
  %1082 = vmatpush1.msra.mxu0 0.0
  %1083 = vmatprep.subr.mxu0 0.0
  %1084 = vmatpush1.msra.mxu0 0.0
  %1085 = vmatprep.subr.mxu0 0.0
  %1086 = vmatpush1.msra.mxu0 0.0
  %1087 = vmatprep.subr.mxu0 0.0
  %1088 = vmatpush1.msra.mxu0 0.0
  %1089 = vmatprep.subr.mxu0 0.0
  %1090 = vmatpush1.msra.mxu0 0.0
  %1091 = vmatprep.subr.mxu0 0.0
  %1092 = vmatpush1.msra.mxu0 0.0
  %1093 = vmatprep.subr.mxu0 0.0
  %1094 = vmatpush1.msra.mxu0 0.0
  %1095 = vmatprep.subr.mxu0 0.0
  %1096 = vmatpush1.msra.mxu0 0.0
  %1097 = vmatprep.subr.mxu0 0.0
  %1098 = vmatpush1.msra.mxu0 0.0
  %1099 = vmatprep.subr.mxu0 0.0
  %1100 = vmatpush1.msra.mxu0 0.0
  %1101 = vmatprep.subr.mxu0 0.0
  %1102 = vmatpush1.msra.mxu0 0.0
  %1103 = vmatprep.subr.mxu0 0.0
  %1104 = vmatpush1.msra.mxu0 0.0
  %1105 = vmatprep.subr.mxu0 0.0
  %1106 = vmatpush1.msra.mxu0 0.0
  %1107 = vmatprep.subr.mxu0 0.0
  %1108 = vmatpush1.msra.mxu0 0.0
  %1109 = vmatprep.subr.mxu0 0.0
  %1110 = vmatpush1.msra.mxu0 %v1074
  %1111 = vmatprep.subr.mxu0 0.0
  %1112 = vmatpush2.msra.mxu0 0.0
  %1113 = vmatprep.subr.mxu0 0.0
  %1114 = vmatpush2.msra.mxu0 0.0
  %1115 = vmatprep.subr.mxu0 0.0
  %1116 = vmatpush2.msra.mxu0 0.0
  %1117 = vmatprep.subr.mxu0 0.0
  %1118 = vmatpush2.msra.mxu0 0.0
  %1119 = vmatprep.subr.mxu0 0.0
  %1120 = vmatpush2.msra.mxu0 0.0
  %1121 = vmatprep.subr.mxu0 0.0
  %1122 = vmatpush2.msra.mxu0 0.0
  %1123 = vmatprep.subr.mxu0 0.0
  %1124 = vmatpush2.msra.mxu0 0.0
  %1125 = vmatprep.subr.mxu0 0.0
  %1126 = vmatpush2.msra.mxu0 0.0
  %1127 = vmatprep.subr.mxu0 0.0
  %1128 = vmatpush2.msra.mxu0 0.0
  %1129 = vmatprep.subr.mxu0 0.0
  %1130 = vmatpush2.msra.mxu0 0.0
  %1131 = vmatprep.subr.mxu0 0.0
  %1132 = vmatpush2.msra.mxu0 0.0
  %1133 = vmatprep.subr.mxu0 0.0
  %1134 = vmatpush2.msra.mxu0 0.0
  %1135 = vmatprep.subr.mxu0 0.0
  %1136 = vmatpush2.msra.mxu0 0.0
  %1137 = vmatprep.subr.mxu0 0.0
  %1138 = vmatpush2.msra.mxu0 0.0
  %1139 = vmatprep.subr.mxu0 0.0
  %1140 = vmatpush2.msra.mxu0 0.0
  %1141 = vmatprep.subr.mxu0 0.0
  %1142 = vmatpush2.msra.mxu0 0.0
  %1143 = vmatprep.mubr.f32.mxu0 0.0
  %1144 = vmatmul.mubr.f32.gmra.mxu0 %v1077
  %v1145 = vpop.f32.mrf.mxu0
  %v1146 = vadd.f32 0.0, %v1145
  %v1147 = vpop.f32.mrf.mxu0
  %1148 = vdwg.mxu0
  %v1149 = vadd.f32 %v980, %v1146
  %1150 = vst.msk [vmem:[%s4 + $0x8] sm:$0xff] %vm136, %v1149
  // Predicated region
  $region18: #{tpu_custom_call.1} parent=0 // pred_check
    _
  $region19: #{tpu_custom_call.1} parent=0 // pred_check_branch
    %1152 = sbr.rel (0) target = $region21
  $region20: #{tpu_custom_call.1} parent=0 // pred_region
    _
  $region21: #{tpu_custom_call.1} parent=0 // pred_fallthru
    _
  // Predicated region
  $region22: #{tpu_custom_call.1} parent=0 // pred_check
    _
  $region23: #{tpu_custom_call.1} parent=0 // pred_check_branch
    %1154 = sbr.rel (0) target = $region25
  $region24: #{tpu_custom_call.1} parent=0 // pred_region
    _
  $region25: #{tpu_custom_call.1} parent=0 // pred_fallthru
    _

</llo_original>
